<compile_context>
chip_gen: v7x
topology: tpu7x:2x2x1
jax: 0.10.0
libtpu: 0.0.40
codegen_flags: <defaults>
</compile_context>

<pallas_src>
import jax
import jax.numpy as jnp
from jax.experimental import pallas as pl
from jax.experimental.pallas import tpu as pltpu

NEG_SLOPE = 0.2  # LeakyReLU negative slope


def _make_residual_block_kernel(C, H, W, B_TILE, neg_slope):
    HW = H * W
    L = B_TILE * HW
    # shifted[q] = v[q + (dy-1)*W + (dx-1)]  (rolls are modular on the lane axis;
    # out-of-image wraps are zeroed by the boundary masks)
    shifts = [((1 - dy) * W + (1 - dx)) % L for dy in range(3) for dx in range(3)]

    def kernel(x_ref, m_ref, w1_ref, b1_ref, w2_ref, b2_ref, o_ref):
        # x_ref : (C, L)    VMEM  -- B_TILE images, batch+spatial on the lane axis
        # m_ref : (9, L)    VMEM  -- 'same'-padding halo masks, grid-resident
        # w*_ref: (C, 9*C)  VMEM  -- conv weights as matmul LHS, grid-resident
        # b*_ref: (C, 1)    VMEM  -- conv biases, grid-resident
        # o_ref : (C, L)    VMEM
        x = x_ref[...]
        m = m_ref[...]

        def im2col(v):
            # 9 shifted+masked views stacked into (9*C, L); rolls use the XLU slot.
            views = []
            for k in range(9):
                s = shifts[k]
                sv = v if s == 0 else pltpu.roll(v, shift=s, axis=1)
                if k != 4:  # center tap never leaves the image
                    sv = sv * m[k:k + 1, :]
                views.append(sv)
            return jnp.concatenate(views, axis=0)

        def conv3x3(v, w_ref, b_ref):
            # (C, 9C) @ (9C, L) on the MXU, f32 accumulation, one broadcast bias add.
            return jnp.dot(w_ref[...], im2col(v),
                           preferred_element_type=jnp.float32,
                           precision=jax.lax.Precision.HIGHEST) + b_ref[...]

        h = conv3x3(x, w1_ref, b1_ref)                 # conv1
        h = jnp.where(h > 0, h, neg_slope * h)         # LeakyReLU(0.2), in vregs
        y = conv3x3(h, w2_ref, b2_ref)                 # conv2
        o_ref[...] = (y + x).astype(o_ref.dtype)       # residual add, lane-dense store

    return kernel


def residual_sequential_forward(x_nchw, params):
    """x_nchw: (N, C, H, W) float32 (PyTorch NCHW convention)."""
    w1, b1, w2, b2 = params
    N, C, H, W = x_nchw.shape
    HW = H * W

    # Pick the largest whole-image batch tile that keeps the lane slab modest.
    B_TILE = 1
    for b in range(1, N + 1):
        if N % b == 0 and b * HW <= 2048:
            B_TILE = b
    g = N // B_TILE
    if g > 1 and (B_TILE * HW) % 128 != 0:   # BlockSpec lane divisibility guard
        B_TILE, g = N, 1
    L = B_TILE * HW

    # Lane-dense layout: (N, C, H, W) -> (C, N*HW), batch folded onto the lane axis.
    x2 = jnp.transpose(x_nchw.astype(jnp.float32), (1, 0, 2, 3)).reshape(C, N * HW)

    # Conv weights as matmul LHS: column index = (dy*3+dx)*C + ci  (matches im2col).
    w1m = jnp.transpose(w1.astype(jnp.float32), (0, 2, 3, 1)).reshape(C, 9 * C)
    w2m = jnp.transpose(w2.astype(jnp.float32), (0, 2, 3, 1)).reshape(C, 9 * C)
    b1m = b1.astype(jnp.float32).reshape(C, 1)
    b2m = b2.astype(jnp.float32).reshape(C, 1)

    # 'same'-padding halo masks, hoisted out of the kernel (grid-resident input).
    p = jnp.arange(HW, dtype=jnp.int32)
    row, col = p // W, p % W
    row_ok = [row >= 1, jnp.ones((HW,), dtype=bool), row <= H - 2]   # dy = 0,1,2
    col_ok = [col >= 1, jnp.ones((HW,), dtype=bool), col <= W - 2]   # dx = 0,1,2
    masks = jnp.stack([jnp.logical_and(row_ok[dy], col_ok[dx])
                       for dy in range(3) for dx in range(3)], axis=0)
    masks = jnp.tile(masks.astype(jnp.float32), (1, B_TILE))         # (9, L)

    resident = lambda i: (0, 0)
    kernel = _make_residual_block_kernel(C, H, W, B_TILE, NEG_SLOPE)

    out = pl.pallas_call(
        kernel,
        out_shape=jax.ShapeDtypeStruct((C, N * HW), jnp.float32),
        grid=(g,),  # image-group grid: v7x's 2 TensorCores split it, free on v5e/v6e
        in_specs=[pl.BlockSpec((C, L), lambda i: (0, i)),   # x (lane-tiled)
                  pl.BlockSpec((9, L), resident),           # halo masks
                  pl.BlockSpec((C, 9 * C), resident),       # w1
                  pl.BlockSpec((C, 1), resident),           # b1
                  pl.BlockSpec((C, 9 * C), resident),       # w2
                  pl.BlockSpec((C, 1), resident)],          # b2
        out_specs=pl.BlockSpec((C, L), lambda i: (0, i)),
        compiler_params=pltpu.CompilerParams(
            dimension_semantics=("parallel",),
            vmem_limit_bytes=32 * 1024 * 1024),
    )(x2, masks, w1m, b1m, w2m, b2m)

    return out.reshape(C, N, H, W).transpose(1, 0, 2, 3)


def _reference(x, params):
    """Pure-JAX reference matching the PyTorch forward."""
    w1, b1, w2, b2 = params
    dn = ('NCHW', 'OIHW', 'NCHW')
    prec = jax.lax.Precision.HIGHEST
    h = jax.lax.conv_general_dilated(x, w1, (1, 1), ((1, 1), (1, 1)),
                                     dimension_numbers=dn, precision=prec)
    h = h + b1[None, :, None, None]
    h = jnp.where(h > 0, h, NEG_SLOPE * h)
    o = jax.lax.conv_general_dilated(h, w2, (1, 1), ((1, 1), (1, 1)),
                                     dimension_numbers=dn, precision=prec)
    o = o + b2[None, :, None, None]
    return o + x  # spatial size preserved -> no interpolate branch


if __name__ == "__main__":
    N, C, H, W = 2, 4, 16, 16
    key = jax.random.PRNGKey(0)
    k1, k2, k3, k4, kx = jax.random.split(key, 5)
    w1 = jax.random.normal(k1, (C, C, 3, 3), jnp.float32) * 0.1
    b1 = jax.random.normal(k2, (C,), jnp.float32) * 0.1
    w2 = jax.random.normal(k3, (C, C, 3, 3), jnp.float32) * 0.1
    b2 = jax.random.normal(k4, (C,), jnp.float32) * 0.1
    x = jax.random.normal(kx, (N, C, H, W), jnp.float32)

    out = residual_sequential_forward(x, (w1, b1, w2, b2))
    out = jax.block_until_ready(out)

    ref = _reference(x, (w1, b1, w2, b2))
    assert out.shape == (N, C, H, W)
    max_err = float(jnp.max(jnp.abs(out - ref)))
    assert jnp.allclose(out, ref, atol=1e-3, rtol=1e-3), f"max_err={max_err}"
    print("KERNEL_OK")
</pallas_src>

<mosaic_0001>
module attributes {stable_mosaic.version = 11 : i64} {
  func.func @kernel(%arg0: i32, %arg1: memref<4x512xf32, #tpu.memory_space<vmem>>, %arg2: memref<9x512xf32, #tpu.memory_space<vmem>>, %arg3: memref<4x36xf32, #tpu.memory_space<vmem>>, %arg4: memref<4x1xf32, #tpu.memory_space<vmem>>, %arg5: memref<4x36xf32, #tpu.memory_space<vmem>>, %arg6: memref<4x1xf32, #tpu.memory_space<vmem>>, %arg7: memref<4x512xf32, #tpu.memory_space<vmem>>) attributes {dimension_semantics = [#tpu.dimension_semantics<parallel>], iteration_bounds = array<i64: 1>, scalar_prefetch = 0 : i64, scratch_operands = 0 : i64, tpu.core_type = #tpu.core_type<tc>, window_params = [{transform_indices = @transform_0, window_bounds = array<i64: 4, 512>}, {pipeline_mode = #tpu.pipeline_mode<synchronous>, transform_indices = @transform_1, window_bounds = array<i64: 9, 512>}, {pipeline_mode = #tpu.pipeline_mode<synchronous>, transform_indices = @transform_2, window_bounds = array<i64: 4, 36>}, {pipeline_mode = #tpu.pipeline_mode<synchronous>, transform_indices = @transform_3, window_bounds = array<i64: 4, 1>}, {pipeline_mode = #tpu.pipeline_mode<synchronous>, transform_indices = @transform_4, window_bounds = array<i64: 4, 36>}, {pipeline_mode = #tpu.pipeline_mode<synchronous>, transform_indices = @transform_5, window_bounds = array<i64: 4, 1>}, {transform_indices = @transform_6, window_bounds = array<i64: 4, 512>}]} {
    %c0 = arith.constant 0 : index
    %c0_0 = arith.constant 0 : index
    %0 = vector.load %arg1[%c0, %c0_0] : memref<4x512xf32, #tpu.memory_space<vmem>>, vector<4x512xf32>
    %c0_1 = arith.constant 0 : index
    %c0_2 = arith.constant 0 : index
    %1 = vector.load %arg2[%c0_1, %c0_2] : memref<9x512xf32, #tpu.memory_space<vmem>>, vector<9x512xf32>
    %c0_3 = arith.constant 0 : index
    %c0_4 = arith.constant 0 : index
    %2 = vector.load %arg3[%c0_3, %c0_4] : memref<4x36xf32, #tpu.memory_space<vmem>>, vector<4x36xf32>
    %c17_i32 = arith.constant 17 : i32
    %3 = tpu.dynamic_rotate %0 by %c17_i32 dim 1 : vector<4x512xf32>, i32 -> vector<4x512xf32>
    %4 = vector.extract_strided_slice %1 {offsets = [0, 0], sizes = [1, 512], strides = [1, 1]} : vector<9x512xf32> to vector<1x512xf32>
    %5 = vector.broadcast %4 : vector<1x512xf32> to vector<4x512xf32>
    %6 = arith.mulf %3, %5 : vector<4x512xf32>
    %c16_i32 = arith.constant 16 : i32
    %7 = tpu.dynamic_rotate %0 by %c16_i32 dim 1 : vector<4x512xf32>, i32 -> vector<4x512xf32>
    %8 = vector.extract_strided_slice %1 {offsets = [1, 0], sizes = [1, 512], strides = [1, 1]} : vector<9x512xf32> to vector<1x512xf32>
    %9 = vector.broadcast %8 : vector<1x512xf32> to vector<4x512xf32>
    %10 = arith.mulf %7, %9 : vector<4x512xf32>
    %c15_i32 = arith.constant 15 : i32
    %11 = tpu.dynamic_rotate %0 by %c15_i32 dim 1 : vector<4x512xf32>, i32 -> vector<4x512xf32>
    %12 = vector.extract_strided_slice %1 {offsets = [2, 0], sizes = [1, 512], strides = [1, 1]} : vector<9x512xf32> to vector<1x512xf32>
    %13 = vector.broadcast %12 : vector<1x512xf32> to vector<4x512xf32>
    %14 = arith.mulf %11, %13 : vector<4x512xf32>
    %c1_i32 = arith.constant 1 : i32
    %15 = tpu.dynamic_rotate %0 by %c1_i32 dim 1 : vector<4x512xf32>, i32 -> vector<4x512xf32>
    %16 = vector.extract_strided_slice %1 {offsets = [3, 0], sizes = [1, 512], strides = [1, 1]} : vector<9x512xf32> to vector<1x512xf32>
    %17 = vector.broadcast %16 : vector<1x512xf32> to vector<4x512xf32>
    %18 = arith.mulf %15, %17 : vector<4x512xf32>
    %c511_i32 = arith.constant 511 : i32
    %19 = tpu.dynamic_rotate %0 by %c511_i32 dim 1 : vector<4x512xf32>, i32 -> vector<4x512xf32>
    %20 = vector.extract_strided_slice %1 {offsets = [5, 0], sizes = [1, 512], strides = [1, 1]} : vector<9x512xf32> to vector<1x512xf32>
    %21 = vector.broadcast %20 : vector<1x512xf32> to vector<4x512xf32>
    %22 = arith.mulf %19, %21 : vector<4x512xf32>
    %c497_i32 = arith.constant 497 : i32
    %23 = tpu.dynamic_rotate %0 by %c497_i32 dim 1 : vector<4x512xf32>, i32 -> vector<4x512xf32>
    %24 = vector.extract_strided_slice %1 {offsets = [6, 0], sizes = [1, 512], strides = [1, 1]} : vector<9x512xf32> to vector<1x512xf32>
    %25 = vector.broadcast %24 : vector<1x512xf32> to vector<4x512xf32>
    %26 = arith.mulf %23, %25 : vector<4x512xf32>
    %c496_i32 = arith.constant 496 : i32
    %27 = tpu.dynamic_rotate %0 by %c496_i32 dim 1 : vector<4x512xf32>, i32 -> vector<4x512xf32>
    %28 = vector.extract_strided_slice %1 {offsets = [7, 0], sizes = [1, 512], strides = [1, 1]} : vector<9x512xf32> to vector<1x512xf32>
    %29 = vector.broadcast %28 : vector<1x512xf32> to vector<4x512xf32>
    %30 = arith.mulf %27, %29 : vector<4x512xf32>
    %c495_i32 = arith.constant 495 : i32
    %31 = tpu.dynamic_rotate %0 by %c495_i32 dim 1 : vector<4x512xf32>, i32 -> vector<4x512xf32>
    %32 = vector.extract_strided_slice %1 {offsets = [8, 0], sizes = [1, 512], strides = [1, 1]} : vector<9x512xf32> to vector<1x512xf32>
    %33 = vector.broadcast %32 : vector<1x512xf32> to vector<4x512xf32>
    %34 = arith.mulf %31, %33 : vector<4x512xf32>
    %35 = tpu.concatenate %6, %10, %14, %18, %0, %22, %26, %30, %34 in 0 : vector<4x512xf32>, vector<4x512xf32>, vector<4x512xf32>, vector<4x512xf32>, vector<4x512xf32>, vector<4x512xf32>, vector<4x512xf32>, vector<4x512xf32>, vector<4x512xf32> -> vector<36x512xf32>
    %cst = arith.constant dense<0.000000e+00> : vector<4x512xf32>
    %36 = tpu.matmul %2, %35, %cst {dimension_numbers = #tpu.dot_dimension_numbers<[1], [0], [0], [1], [0, 0, 1, 1], [], []>, precision = #tpu.contract_precision<fp32>} : vector<4x36xf32>, vector<36x512xf32>, vector<4x512xf32> -> vector<4x512xf32>
    %c0_5 = arith.constant 0 : index
    %c0_6 = arith.constant 0 : index
    %37 = vector.load %arg4[%c0_5, %c0_6] : memref<4x1xf32, #tpu.memory_space<vmem>>, vector<4x1xf32>
    %38 = vector.broadcast %37 : vector<4x1xf32> to vector<4x512xf32>
    %39 = arith.addf %36, %38 : vector<4x512xf32>
    %cst_7 = arith.constant 0.000000e+00 : f32
    %40 = vector.broadcast %cst_7 : f32 to vector<4x512xf32>
    %41 = arith.cmpf ogt, %39, %40 : vector<4x512xf32>
    %cst_8 = arith.constant 2.000000e-01 : f32
    %42 = vector.broadcast %cst_8 : f32 to vector<4x512xf32>
    %43 = arith.mulf %42, %39 : vector<4x512xf32>
    %44 = arith.select %41, %39, %43 : vector<4x512xi1>, vector<4x512xf32>
    %c0_9 = arith.constant 0 : index
    %c0_10 = arith.constant 0 : index
    %45 = vector.load %arg5[%c0_9, %c0_10] : memref<4x36xf32, #tpu.memory_space<vmem>>, vector<4x36xf32>
    %c17_i32_11 = arith.constant 17 : i32
    %46 = tpu.dynamic_rotate %44 by %c17_i32_11 dim 1 : vector<4x512xf32>, i32 -> vector<4x512xf32>
    %47 = vector.extract_strided_slice %1 {offsets = [0, 0], sizes = [1, 512], strides = [1, 1]} : vector<9x512xf32> to vector<1x512xf32>
    %48 = vector.broadcast %47 : vector<1x512xf32> to vector<4x512xf32>
    %49 = arith.mulf %46, %48 : vector<4x512xf32>
    %c16_i32_12 = arith.constant 16 : i32
    %50 = tpu.dynamic_rotate %44 by %c16_i32_12 dim 1 : vector<4x512xf32>, i32 -> vector<4x512xf32>
    %51 = vector.extract_strided_slice %1 {offsets = [1, 0], sizes = [1, 512], strides = [1, 1]} : vector<9x512xf32> to vector<1x512xf32>
    %52 = vector.broadcast %51 : vector<1x512xf32> to vector<4x512xf32>
    %53 = arith.mulf %50, %52 : vector<4x512xf32>
    %c15_i32_13 = arith.constant 15 : i32
    %54 = tpu.dynamic_rotate %44 by %c15_i32_13 dim 1 : vector<4x512xf32>, i32 -> vector<4x512xf32>
    %55 = vector.extract_strided_slice %1 {offsets = [2, 0], sizes = [1, 512], strides = [1, 1]} : vector<9x512xf32> to vector<1x512xf32>
    %56 = vector.broadcast %55 : vector<1x512xf32> to vector<4x512xf32>
    %57 = arith.mulf %54, %56 : vector<4x512xf32>
    %c1_i32_14 = arith.constant 1 : i32
    %58 = tpu.dynamic_rotate %44 by %c1_i32_14 dim 1 : vector<4x512xf32>, i32 -> vector<4x512xf32>
    %59 = vector.extract_strided_slice %1 {offsets = [3, 0], sizes = [1, 512], strides = [1, 1]} : vector<9x512xf32> to vector<1x512xf32>
    %60 = vector.broadcast %59 : vector<1x512xf32> to vector<4x512xf32>
    %61 = arith.mulf %58, %60 : vector<4x512xf32>
    %c511_i32_15 = arith.constant 511 : i32
    %62 = tpu.dynamic_rotate %44 by %c511_i32_15 dim 1 : vector<4x512xf32>, i32 -> vector<4x512xf32>
    %63 = vector.extract_strided_slice %1 {offsets = [5, 0], sizes = [1, 512], strides = [1, 1]} : vector<9x512xf32> to vector<1x512xf32>
    %64 = vector.broadcast %63 : vector<1x512xf32> to vector<4x512xf32>
    %65 = arith.mulf %62, %64 : vector<4x512xf32>
    %c497_i32_16 = arith.constant 497 : i32
    %66 = tpu.dynamic_rotate %44 by %c497_i32_16 dim 1 : vector<4x512xf32>, i32 -> vector<4x512xf32>
    %67 = vector.extract_strided_slice %1 {offsets = [6, 0], sizes = [1, 512], strides = [1, 1]} : vector<9x512xf32> to vector<1x512xf32>
    %68 = vector.broadcast %67 : vector<1x512xf32> to vector<4x512xf32>
    %69 = arith.mulf %66, %68 : vector<4x512xf32>
    %c496_i32_17 = arith.constant 496 : i32
    %70 = tpu.dynamic_rotate %44 by %c496_i32_17 dim 1 : vector<4x512xf32>, i32 -> vector<4x512xf32>
    %71 = vector.extract_strided_slice %1 {offsets = [7, 0], sizes = [1, 512], strides = [1, 1]} : vector<9x512xf32> to vector<1x512xf32>
    %72 = vector.broadcast %71 : vector<1x512xf32> to vector<4x512xf32>
    %73 = arith.mulf %70, %72 : vector<4x512xf32>
    %c495_i32_18 = arith.constant 495 : i32
    %74 = tpu.dynamic_rotate %44 by %c495_i32_18 dim 1 : vector<4x512xf32>, i32 -> vector<4x512xf32>
    %75 = vector.extract_strided_slice %1 {offsets = [8, 0], sizes = [1, 512], strides = [1, 1]} : vector<9x512xf32> to vector<1x512xf32>
    %76 = vector.broadcast %75 : vector<1x512xf32> to vector<4x512xf32>
    %77 = arith.mulf %74, %76 : vector<4x512xf32>
    %78 = tpu.concatenate %49, %53, %57, %61, %44, %65, %69, %73, %77 in 0 : vector<4x512xf32>, vector<4x512xf32>, vector<4x512xf32>, vector<4x512xf32>, vector<4x512xf32>, vector<4x512xf32>, vector<4x512xf32>, vector<4x512xf32>, vector<4x512xf32> -> vector<36x512xf32>
    %cst_19 = arith.constant dense<0.000000e+00> : vector<4x512xf32>
    %79 = tpu.matmul %45, %78, %cst_19 {dimension_numbers = #tpu.dot_dimension_numbers<[1], [0], [0], [1], [0, 0, 1, 1], [], []>, precision = #tpu.contract_precision<fp32>} : vector<4x36xf32>, vector<36x512xf32>, vector<4x512xf32> -> vector<4x512xf32>
    %c0_20 = arith.constant 0 : index
    %c0_21 = arith.constant 0 : index
    %80 = vector.load %arg6[%c0_20, %c0_21] : memref<4x1xf32, #tpu.memory_space<vmem>>, vector<4x1xf32>
    %81 = vector.broadcast %80 : vector<4x1xf32> to vector<4x512xf32>
    %82 = arith.addf %79, %81 : vector<4x512xf32>
    %83 = arith.addf %82, %0 : vector<4x512xf32>
    %c0_22 = arith.constant 0 : index
    %c0_23 = arith.constant 0 : index
    %84 = vector.load %arg7[%c0_22, %c0_23] : memref<4x512xf32, #tpu.memory_space<vmem>>, vector<4x512xf32>
    tpu.vector_store %arg7[%c0_22, %c0_23], %83 {strides = array<i32>} : memref<4x512xf32, #tpu.memory_space<vmem>>, vector<4x512xf32>,
    return
  }
  func.func @transform_0(%arg0: i32) -> (i32, i32) {
    %c0_i32 = arith.constant 0 : i32
    %c0_i32_0 = arith.constant 0 : i32
    return %c0_i32, %arg0 : i32, i32
  }
  func.func @transform_1(%arg0: i32) -> (i32, i32) {
    %c0_i32 = arith.constant 0 : i32
    %c0_i32_0 = arith.constant 0 : i32
    %c0_i32_1 = arith.constant 0 : i32
    return %c0_i32, %c0_i32_0 : i32, i32
  }
  func.func @transform_2(%arg0: i32) -> (i32, i32) {
    %c0_i32 = arith.constant 0 : i32
    %c0_i32_0 = arith.constant 0 : i32
    %c0_i32_1 = arith.constant 0 : i32
    return %c0_i32, %c0_i32_0 : i32, i32
  }
  func.func @transform_3(%arg0: i32) -> (i32, i32) {
    %c0_i32 = arith.constant 0 : i32
    %c0_i32_0 = arith.constant 0 : i32
    %c0_i32_1 = arith.constant 0 : i32
    return %c0_i32, %c0_i32_0 : i32, i32
  }
  func.func @transform_4(%arg0: i32) -> (i32, i32) {
    %c0_i32 = arith.constant 0 : i32
    %c0_i32_0 = arith.constant 0 : i32
    %c0_i32_1 = arith.constant 0 : i32
    return %c0_i32, %c0_i32_0 : i32, i32
  }
  func.func @transform_5(%arg0: i32) -> (i32, i32) {
    %c0_i32 = arith.constant 0 : i32
    %c0_i32_0 = arith.constant 0 : i32
    %c0_i32_1 = arith.constant 0 : i32
    return %c0_i32, %c0_i32_0 : i32, i32
  }
  func.func @transform_6(%arg0: i32) -> (i32, i32) {
    %c0_i32 = arith.constant 0 : i32
    %c0_i32_0 = arith.constant 0 : i32
    return %c0_i32, %arg0 : i32, i32
  }
}

</mosaic_0001>

<llo_original>
// kernel: tpu_custom_call.1
$region0: #{tpu_custom_call.1}
  #allocation0 [shape = 'u32[]', space=smem, size = 0x4, offset = 0x4, fixed_abs, tag = 'smem constant byte address 0x4 - core index']
  #allocation1 [shape = 'u32[144,128]{1,0:T(1,128)}', space=vmem, size = 0x12000, scoped, tag = 'internal scratch']
  %s0 = inlined_call_operand.hbm [shape: f32[4,512], index: 0, kind: input, shape index: {}]
  %s1 = inlined_call_operand.hbm [shape: f32[9,512], index: 1, kind: input, shape index: {}]
  %s2 = inlined_call_operand.vmem [shape: f32[4,36], index: 2, kind: input, shape index: {}]
  %s3 = inlined_call_operand.vmem [shape: f32[4,1], index: 3, kind: input, shape index: {}]
  %s4 = inlined_call_operand.vmem [shape: f32[4,36], index: 4, kind: input, shape index: {}]
  %s5 = inlined_call_operand.vmem [shape: f32[4,1], index: 5, kind: input, shape index: {}]
  %s6 = inlined_call_operand.hbm [shape: f32[4,512], index: 6, kind: output, shape index: {}]
  %s7 = sld [smem:[#allocation0]]
  $region42: #{tpu_custom_call.1} parent=0
    _
  %s9 = ssub.s32 1, %s7
  %s10 = scalar_select 0, %s9, %s7
  $region1: #{tpu_custom_call.1} parent=0
    #allocation2 [shape = 'u8[8192]{0}', space=vmem, size = 0x2000, scoped, tag = 'input window, operand 0, single buffered']
    #allocation3 [shape = 's32[1]{0}', space=sflag, size = 0x4, scoped, tag = 'scoped memory for tpu_custom_call.1']
    #allocation4 [shape = 's32[1]{0}', space=sflag, size = 0x4, scoped, tag = 'scoped memory for tpu_custom_call.1']
    #allocation5 [shape = 'u8[32768]{0}', space=vmem, size = 0x8000, scoped, tag = 'input window, operand 1, single buffered']
    #allocation6 [shape = 's32[1]{0}', space=sflag, size = 0x4, scoped, tag = 'scoped memory for tpu_custom_call.1']
    #allocation7 [shape = 'u8[8192]{0}', space=vmem, size = 0x2000, scoped, tag = 'output window, operand 0, single buffered']
    %11 = vsyncpa [#allocation3], 0
    %12 = vsyncpa [#allocation6], 0
    %13 = vsyncpa [#allocation4], 0
    // Predicated region
    $region2: #{tpu_custom_call.1} parent=1 // pred_check
      _
    $region3: #{tpu_custom_call.1} parent=1 // pred_check_branch
      %15 = sbr.rel (0) target = $region5
    $region4: #{tpu_custom_call.1} parent=1 // pred_region
      %s17 = ssub.s32 256, 256
      %18 = vsyncadd [#allocation3], %s17
      %s20 = sshll.u32 [#allocation2], 4
      %s21 = int_to_ptr.vmem [resolvable:$true] %s20
      %23 = dma.hbm_to_vmem [thread:$0]  %s0, 256, %s21, [#allocation3]
    $region5: #{tpu_custom_call.1} parent=1 // pred_fallthru
      _
    // Predicated region
    $region6: #{tpu_custom_call.1} parent=1 // pred_check
      _
    $region7: #{tpu_custom_call.1} parent=1 // pred_check_branch
      %25 = sbr.rel (0) target = $region9
    $region8: #{tpu_custom_call.1} parent=1 // pred_region
      %s27 = ssub.s32 1024, 1024
      %28 = vsyncadd [#allocation6], %s27
      %s29 = sshll.u32 [#allocation5], 4
      %s30 = int_to_ptr.vmem [resolvable:$true] %s29
      %35 = dma.hbm_to_vmem [thread:$0]  %s1, 1024, %s30, [#allocation6], 512, 512, 32
    $region9: #{tpu_custom_call.1} parent=1 // pred_fallthru
      _
    // Predicated region
    $region10: #{tpu_custom_call.1} parent=1 // pred_check
      _
    $region11: #{tpu_custom_call.1} parent=1 // pred_check_branch
      %37 = sbr.rel (0) target = $region13
    $region12: #{tpu_custom_call.1} parent=1 // pred_region
      _
    $region13: #{tpu_custom_call.1} parent=1 // pred_fallthru
      _
    // Predicated region
    $region14: #{tpu_custom_call.1} parent=1 // pred_check
      _
    $region15: #{tpu_custom_call.1} parent=1 // pred_check_branch
      %39 = sbr.rel (0) target = $region17
    $region16: #{tpu_custom_call.1} parent=1 // pred_region
      _
    $region17: #{tpu_custom_call.1} parent=1 // pred_fallthru
      _
    // Predicated region
    $region18: #{tpu_custom_call.1} parent=1 // pred_check
      _
    $region19: #{tpu_custom_call.1} parent=1 // pred_check_branch
      %41 = sbr.rel (0) target = $region21
    $region20: #{tpu_custom_call.1} parent=1 // pred_region
      _
    $region21: #{tpu_custom_call.1} parent=1 // pred_fallthru
      _
    // Predicated region
    $region22: #{tpu_custom_call.1} parent=1 // pred_check
      _
    $region23: #{tpu_custom_call.1} parent=1 // pred_check_branch
      %43 = sbr.rel (0) target = $region25
    $region24: #{tpu_custom_call.1} parent=1 // pred_region
      _
    $region25: #{tpu_custom_call.1} parent=1 // pred_fallthru
      _
    // Predicated region
    $region26: #{tpu_custom_call.1} parent=1 // pred_check
      _
    $region27: #{tpu_custom_call.1} parent=1 // pred_check_branch
      %45 = sbr.rel (0) target = $region29
    $region28: #{tpu_custom_call.1} parent=1 // pred_region
      %46 = dma.done [#allocation3], 256
    $region29: #{tpu_custom_call.1} parent=1 // pred_fallthru
      _
    // Predicated region
    $region30: #{tpu_custom_call.1} parent=1 // pred_check
      _
    $region31: #{tpu_custom_call.1} parent=1 // pred_check_branch
      %48 = sbr.rel (0) target = $region33
    $region32: #{tpu_custom_call.1} parent=1 // pred_region
      %49 = dma.done [#allocation6], 1024
    $region33: #{tpu_custom_call.1} parent=1 // pred_fallthru
      _
    %v50 = vld [vmem:[#allocation2] sm:$0xff]
    %v51 = vld [vmem:[#allocation2 + $0x8] sm:$0xff]
    %v52 = vld [vmem:[#allocation5] sm:$0xff]
    %v53 = vld [vmem:[#allocation5 + $0x8] sm:$0xff]
    %v54 = vld [vmem:[#allocation5 + $0x10] sm:$0xff]
    %v55 = vld [vmem:[#allocation5 + $0x18] sm:$0xff]
    %v56 = vld [vmem:[#allocation5 + $0x20] sm:$0x1]
    %v57 = vld [vmem:[#allocation5 + $0x28] sm:$0x1]
    %v58 = vld [vmem:[#allocation5 + $0x30] sm:$0x1]
    %v59 = vld [vmem:[#allocation5 + $0x38] sm:$0x1]
    %v60 = vld [vmem:[%s2] sm:$0xf]
    %v63 = vcombine.high %v50, %v50
    %v64 = vcombine.high %v51, %v51
    %67 = vrot.lane.b32.xlu0 %v50, 17
    %v68 = vpop.permute.xlu0 %67
    %69 = vrot.lane.b32.xlu0 %v63, 17
    %v70 = vpop.permute.xlu0 %69
    %71 = vrot.lane.b32.xlu0 %v51, 17
    %v72 = vpop.permute.xlu0 %71
    %73 = vrot.lane.b32.xlu0 %v64, 17
    %v74 = vpop.permute.xlu0 %73
    %v75 = vlaneseq
    %v76 = vand.u32 %v75, 127
    %vm77 = vcmp.lt.s32.totalorder %v76, 17
    %v78 = vsel %vm77, %v72, %v74
    %v79 = vsel %vm77, %v70, %v72
    %v80 = vsel %vm77, %v68, %v70
    %v81 = vsel %vm77, %v74, %v68
    %v82 = vlaneseq
    %v83 = vshrl.u32 %v82, 7
    %v84 = vsub.s32 0, %v83
    %v85 = vrot.slane %v52, %v84
    %v86 = vlaneseq
    %v87 = vshrl.u32 %v86, 7
    %v88 = vsub.s32 0, %v87
    %v89 = vrot.slane %v53, %v88
    %v90 = vlaneseq
    %v91 = vshrl.u32 %v90, 7
    %v92 = vsub.s32 0, %v91
    %v93 = vrot.slane %v54, %v92
    %v94 = vlaneseq
    %v95 = vshrl.u32 %v94, 7
    %v96 = vsub.s32 0, %v95
    %v97 = vrot.slane %v55, %v96
    %v98 = vmul.f32 %v81, %v85
    %v99 = vmul.f32 %v80, %v89
    %v100 = vmul.f32 %v79, %v93
    %v101 = vmul.f32 %v78, %v97
    %102 = vrot.lane.b32.xlu0 %v50, 16
    %v103 = vpop.permute.xlu0 %102
    %104 = vrot.lane.b32.xlu0 %v63, 16
    %v105 = vpop.permute.xlu0 %104
    %106 = vrot.lane.b32.xlu0 %v51, 16
    %v107 = vpop.permute.xlu0 %106
    %108 = vrot.lane.b32.xlu0 %v64, 16
    %v109 = vpop.permute.xlu0 %108
    %vm110 = vcmp.lt.s32.totalorder %v76, 16
    %v111 = vsel %vm110, %v107, %v109
    %v112 = vsel %vm110, %v105, %v107
    %v113 = vsel %vm110, %v103, %v105
    %v114 = vsel %vm110, %v109, %v103
    %v115 = vlaneseq
    %v116 = vshrl.u32 %v115, 7
    %v117 = vsub.s32 1, %v116
    %v118 = vrot.slane %v52, %v117
    %v119 = vlaneseq
    %v120 = vshrl.u32 %v119, 7
    %v121 = vsub.s32 1, %v120
    %v122 = vrot.slane %v53, %v121
    %v123 = vlaneseq
    %v124 = vshrl.u32 %v123, 7
    %v125 = vsub.s32 1, %v124
    %v126 = vrot.slane %v54, %v125
    %v127 = vlaneseq
    %v128 = vshrl.u32 %v127, 7
    %v129 = vsub.s32 1, %v128
    %v130 = vrot.slane %v55, %v129
    %v131 = vmul.f32 %v114, %v118
    %v132 = vmul.f32 %v113, %v122
    %v133 = vmul.f32 %v112, %v126
    %v134 = vmul.f32 %v111, %v130
    %135 = vrot.lane.b32.xlu0 %v50, 15
    %v136 = vpop.permute.xlu0 %135
    %137 = vrot.lane.b32.xlu0 %v63, 15
    %v138 = vpop.permute.xlu0 %137
    %139 = vrot.lane.b32.xlu0 %v51, 15
    %v140 = vpop.permute.xlu0 %139
    %141 = vrot.lane.b32.xlu0 %v64, 15
    %v142 = vpop.permute.xlu0 %141
    %vm143 = vcmp.lt.s32.totalorder %v76, 15
    %v144 = vsel %vm143, %v140, %v142
    %v145 = vsel %vm143, %v138, %v140
    %v146 = vsel %vm143, %v136, %v138
    %v147 = vsel %vm143, %v142, %v136
    %v148 = vlaneseq
    %v149 = vshrl.u32 %v148, 7
    %v150 = vsub.s32 2, %v149
    %v151 = vrot.slane %v52, %v150
    %v152 = vlaneseq
    %v153 = vshrl.u32 %v152, 7
    %v154 = vsub.s32 2, %v153
    %v155 = vrot.slane %v53, %v154
    %v156 = vlaneseq
    %v157 = vshrl.u32 %v156, 7
    %v158 = vsub.s32 2, %v157
    %v159 = vrot.slane %v54, %v158
    %v160 = vlaneseq
    %v161 = vshrl.u32 %v160, 7
    %v162 = vsub.s32 2, %v161
    %v163 = vrot.slane %v55, %v162
    %v164 = vmul.f32 %v147, %v151
    %v165 = vmul.f32 %v146, %v155
    %v166 = vmul.f32 %v145, %v159
    %v167 = vmul.f32 %v144, %v163
    %168 = vrot.lane.b32.xlu0 %v50, 1
    %v169 = vpop.permute.xlu0 %168
    %170 = vrot.lane.b32.xlu0 %v63, 1
    %v171 = vpop.permute.xlu0 %170
    %172 = vrot.lane.b32.xlu0 %v51, 1
    %v173 = vpop.permute.xlu0 %172
    %174 = vrot.lane.b32.xlu0 %v64, 1
    %v175 = vpop.permute.xlu0 %174
    %vm176 = vcmp.lt.s32.totalorder %v76, 1
    %v177 = vsel %vm176, %v173, %v175
    %v178 = vsel %vm176, %v171, %v173
    %v179 = vsel %vm176, %v169, %v171
    %v180 = vsel %vm176, %v175, %v169
    %v181 = vlaneseq
    %v182 = vshrl.u32 %v181, 7
    %v183 = vsub.s32 3, %v182
    %v184 = vrot.slane %v52, %v183
    %v185 = vlaneseq
    %v186 = vshrl.u32 %v185, 7
    %v187 = vsub.s32 3, %v186
    %v188 = vrot.slane %v53, %v187
    %v189 = vlaneseq
    %v190 = vshrl.u32 %v189, 7
    %v191 = vsub.s32 3, %v190
    %v192 = vrot.slane %v54, %v191
    %v193 = vlaneseq
    %v194 = vshrl.u32 %v193, 7
    %v195 = vsub.s32 3, %v194
    %v196 = vrot.slane %v55, %v195
    %v197 = vmul.f32 %v180, %v184
    %v198 = vmul.f32 %v179, %v188
    %v199 = vmul.f32 %v178, %v192
    %v200 = vmul.f32 %v177, %v196
    %201 = vrot.lane.b32.xlu0 %v50, 127
    %v202 = vpop.permute.xlu0 %201
    %203 = vrot.lane.b32.xlu0 %v63, 127
    %v204 = vpop.permute.xlu0 %203
    %205 = vrot.lane.b32.xlu0 %v51, 127
    %v206 = vpop.permute.xlu0 %205
    %207 = vrot.lane.b32.xlu0 %v64, 127
    %v208 = vpop.permute.xlu0 %207
    %vm209 = vcmp.lt.s32.totalorder %v76, 127
    %v210 = vsel %vm209, %v206, %v208
    %v211 = vsel %vm209, %v204, %v206
    %v212 = vsel %vm209, %v202, %v204
    %v213 = vsel %vm209, %v208, %v202
    %v214 = vlaneseq
    %v215 = vshrl.u32 %v214, 7
    %v216 = vsub.s32 5, %v215
    %v217 = vrot.slane %v52, %v216
    %v218 = vlaneseq
    %v219 = vshrl.u32 %v218, 7
    %v220 = vsub.s32 5, %v219
    %v221 = vrot.slane %v53, %v220
    %v222 = vlaneseq
    %v223 = vshrl.u32 %v222, 7
    %v224 = vsub.s32 5, %v223
    %v225 = vrot.slane %v54, %v224
    %v226 = vlaneseq
    %v227 = vshrl.u32 %v226, 7
    %v228 = vsub.s32 5, %v227
    %v229 = vrot.slane %v55, %v228
    %v230 = vmul.f32 %v212, %v217
    %v231 = vmul.f32 %v211, %v221
    %v232 = vmul.f32 %v210, %v225
    %v233 = vmul.f32 %v213, %v229
    %234 = vrot.lane.b32.xlu0 %v50, 113
    %v235 = vpop.permute.xlu0 %234
    %236 = vrot.lane.b32.xlu0 %v63, 113
    %v237 = vpop.permute.xlu0 %236
    %238 = vrot.lane.b32.xlu0 %v51, 113
    %v239 = vpop.permute.xlu0 %238
    %240 = vrot.lane.b32.xlu0 %v64, 113
    %v241 = vpop.permute.xlu0 %240
    %vm242 = vcmp.lt.s32.totalorder %v76, 113
    %v243 = vsel %vm242, %v239, %v241
    %v244 = vsel %vm242, %v237, %v239
    %v245 = vsel %vm242, %v235, %v237
    %v246 = vsel %vm242, %v241, %v235
    %v247 = vlaneseq
    %v248 = vshrl.u32 %v247, 7
    %v249 = vsub.s32 6, %v248
    %v250 = vrot.slane %v52, %v249
    %v251 = vlaneseq
    %v252 = vshrl.u32 %v251, 7
    %v253 = vsub.s32 6, %v252
    %v254 = vrot.slane %v53, %v253
    %v255 = vlaneseq
    %v256 = vshrl.u32 %v255, 7
    %v257 = vsub.s32 6, %v256
    %v258 = vrot.slane %v54, %v257
    %v259 = vlaneseq
    %v260 = vshrl.u32 %v259, 7
    %v261 = vsub.s32 6, %v260
    %v262 = vrot.slane %v55, %v261
    %v263 = vmul.f32 %v245, %v250
    %v264 = vmul.f32 %v244, %v254
    %v265 = vmul.f32 %v243, %v258
    %v266 = vmul.f32 %v246, %v262
    %267 = vrot.lane.b32.xlu0 %v50, 112
    %v268 = vpop.permute.xlu0 %267
    %269 = vrot.lane.b32.xlu0 %v63, 112
    %v270 = vpop.permute.xlu0 %269
    %271 = vrot.lane.b32.xlu0 %v51, 112
    %v272 = vpop.permute.xlu0 %271
    %273 = vrot.lane.b32.xlu0 %v64, 112
    %v274 = vpop.permute.xlu0 %273
    %vm275 = vcmp.lt.s32.totalorder %v76, 112
    %v276 = vsel %vm275, %v272, %v274
    %v277 = vsel %vm275, %v270, %v272
    %v278 = vsel %vm275, %v268, %v270
    %v279 = vsel %vm275, %v274, %v268
    %v280 = vlaneseq
    %v281 = vshrl.u32 %v280, 7
    %v282 = vsub.s32 7, %v281
    %v283 = vrot.slane %v52, %v282
    %v284 = vlaneseq
    %v285 = vshrl.u32 %v284, 7
    %v286 = vsub.s32 7, %v285
    %v287 = vrot.slane %v53, %v286
    %v288 = vlaneseq
    %v289 = vshrl.u32 %v288, 7
    %v290 = vsub.s32 7, %v289
    %v291 = vrot.slane %v54, %v290
    %v292 = vlaneseq
    %v293 = vshrl.u32 %v292, 7
    %v294 = vsub.s32 7, %v293
    %v295 = vrot.slane %v55, %v294
    %v296 = vmul.f32 %v278, %v283
    %v297 = vmul.f32 %v277, %v287
    %v298 = vmul.f32 %v276, %v291
    %v299 = vmul.f32 %v279, %v295
    %300 = vrot.lane.b32.xlu0 %v50, 111
    %v301 = vpop.permute.xlu0 %300
    %302 = vrot.lane.b32.xlu0 %v63, 111
    %v303 = vpop.permute.xlu0 %302
    %304 = vrot.lane.b32.xlu0 %v51, 111
    %v305 = vpop.permute.xlu0 %304
    %306 = vrot.lane.b32.xlu0 %v64, 111
    %v307 = vpop.permute.xlu0 %306
    %vm308 = vcmp.lt.s32.totalorder %v76, 111
    %v309 = vsel %vm308, %v305, %v307
    %v310 = vsel %vm308, %v303, %v305
    %v311 = vsel %vm308, %v301, %v303
    %v312 = vsel %vm308, %v307, %v301
    %v313 = vlaneseq
    %v314 = vshrl.u32 %v313, 7
    %v315 = vsub.s32 0, %v314
    %v316 = vrot.slane %v56, %v315
    %v317 = vlaneseq
    %v318 = vshrl.u32 %v317, 7
    %v319 = vsub.s32 0, %v318
    %v320 = vrot.slane %v57, %v319
    %v321 = vlaneseq
    %v322 = vshrl.u32 %v321, 7
    %v323 = vsub.s32 0, %v322
    %v324 = vrot.slane %v58, %v323
    %v325 = vlaneseq
    %v326 = vshrl.u32 %v325, 7
    %v327 = vsub.s32 0, %v326
    %v328 = vrot.slane %v59, %v327
    %v329 = vmul.f32 %v311, %v316
    %v330 = vmul.f32 %v310, %v320
    %v331 = vmul.f32 %v309, %v324
    %v332 = vmul.f32 %v312, %v328
    %v337 = vrot.slane %v131, 4
    %v338 = vrot.slane %v132, 4
    %v339 = vrot.slane %v133, 4
    %v340 = vrot.slane %v134, 4
    %v349 = vrot.slane %v197, 4
    %v350 = vrot.slane %v198, 4
    %v351 = vrot.slane %v199, 4
    %v352 = vrot.slane %v200, 4
    %v361 = vrot.slane %v230, 4
    %v362 = vrot.slane %v231, 4
    %v363 = vrot.slane %v232, 4
    %v364 = vrot.slane %v233, 4
    %v373 = vrot.slane %v296, 4
    %v374 = vrot.slane %v297, 4
    %v375 = vrot.slane %v298, 4
    %v376 = vrot.slane %v299, 4
    %vm381 = vcmask 1043456
    %v382 = vsel %vm381, %v98, %v337
    %v383 = vsel %vm381, %v99, %v338
    %v384 = vsel %vm381, %v100, %v339
    %v385 = vsel %vm381, %v101, %v340
    %v386 = vsel %vm381, %v164, %v349
    %v387 = vsel %vm381, %v165, %v350
    %v388 = vsel %vm381, %v166, %v351
    %v389 = vsel %vm381, %v167, %v352
    %v390 = vsel %vm381, %v50, %v361
    %v391 = vsel %vm381, %v63, %v362
    %v392 = vsel %vm381, %v51, %v363
    %v393 = vsel %vm381, %v64, %v364
    %v394 = vsel %vm381, %v263, %v373
    %v395 = vsel %vm381, %v264, %v374
    %v396 = vsel %vm381, %v265, %v375
    %v397 = vsel %vm381, %v266, %v376
    %v398 = vld [vmem:[%s3] sm:$0xf]
    %400 = vset.pattern.permute.xlu0 0
    %401 = vperm.xlu0 %400, %v398
    %v402 = vpop.permute.xlu0 %401
    %vm404 = vcmask 293888
    %v406 = vsel %vm404, %v60, 0
    %v409 = vsel %vm381, %v329, 0
    %v412 = vsel %vm381, %v330, 0
    %v415 = vsel %vm381, %v331, 0
    %v418 = vsel %vm381, %v332, 0
    %v420 = vand.u32 %v383, 4294901760
    %421 = vmatprep.subr.mxu0 %v420
    %v422 = vand.u32 %v382, 4294901760
    %423 = vmatpush1.msra.mxu0 %v422
    %v424 = vand.u32 %v387, 4294901760
    %425 = vmatprep.subr.mxu0 %v424
    %v426 = vand.u32 %v386, 4294901760
    %427 = vmatpush1.msra.mxu0 %v426
    %v428 = vand.u32 %v391, 4294901760
    %429 = vmatprep.subr.mxu0 %v428
    %v430 = vand.u32 %v390, 4294901760
    %431 = vmatpush1.msra.mxu0 %v430
    %v432 = vand.u32 %v395, 4294901760
    %433 = vmatprep.subr.mxu0 %v432
    %v434 = vand.u32 %v394, 4294901760
    %435 = vmatpush1.msra.mxu0 %v434
    %v436 = vand.u32 %v412, 4294901760
    %437 = vmatprep.subr.mxu0 %v436
    %v438 = vand.u32 %v409, 4294901760
    %439 = vmatpush1.msra.mxu0 %v438
    %440 = vmatprep.subr.mxu0 0.0
    %441 = vmatpush1.msra.mxu0 0.0
    %442 = vmatprep.subr.mxu0 0.0
    %443 = vmatpush1.msra.mxu0 0.0
    %444 = vmatprep.subr.mxu0 0.0
    %445 = vmatpush1.msra.mxu0 0.0
    %446 = vmatprep.subr.mxu0 0.0
    %447 = vmatpush1.msra.mxu0 0.0
    %448 = vmatprep.subr.mxu0 0.0
    %449 = vmatpush1.msra.mxu0 0.0
    %450 = vmatprep.subr.mxu0 0.0
    %451 = vmatpush1.msra.mxu0 0.0
    %452 = vmatprep.subr.mxu0 0.0
    %453 = vmatpush1.msra.mxu0 0.0
    %454 = vmatprep.subr.mxu0 0.0
    %455 = vmatpush1.msra.mxu0 0.0
    %456 = vmatprep.subr.mxu0 0.0
    %457 = vmatpush1.msra.mxu0 0.0
    %458 = vmatprep.subr.mxu0 0.0
    %459 = vmatpush1.msra.mxu0 0.0
    %460 = vmatprep.subr.mxu0 0.0
    %461 = vmatpush1.msra.mxu0 0.0
    %462 = vmatprep.subr.mxu0 0.0
    %463 = vmatpush1.msra.mxu0 0.0
    %464 = vmatprep.subr.mxu0 0.0
    %465 = vmatpush1.msra.mxu0 0.0
    %466 = vmatprep.subr.mxu0 0.0
    %467 = vmatpush1.msra.mxu0 0.0
    %468 = vmatprep.subr.mxu0 0.0
    %469 = vmatpush1.msra.mxu0 0.0
    %470 = vmatprep.subr.mxu0 0.0
    %471 = vmatpush1.msra.mxu0 0.0
    %472 = vmatprep.subr.mxu0 0.0
    %473 = vmatpush1.msra.mxu0 0.0
    %474 = vmatprep.subr.mxu0 0.0
    %475 = vmatpush1.msra.mxu0 0.0
    %476 = vmatprep.subr.mxu0 0.0
    %477 = vmatpush1.msra.mxu0 0.0
    %478 = vmatprep.subr.mxu0 0.0
    %479 = vmatpush1.msra.mxu0 0.0
    %480 = vmatprep.subr.mxu0 0.0
    %481 = vmatpush1.msra.mxu0 0.0
    %482 = vmatprep.subr.mxu0 0.0
    %483 = vmatpush1.msra.mxu0 0.0
    %484 = vmatprep.subr.mxu0 0.0
    %485 = vmatpush1.msra.mxu0 0.0
    %486 = vmatprep.subr.mxu0 0.0
    %487 = vmatpush1.msra.mxu0 0.0
    %488 = vmatprep.subr.mxu0 0.0
    %489 = vmatpush1.msra.mxu0 0.0
    %490 = vmatprep.subr.mxu0 0.0
    %491 = vmatpush1.msra.mxu0 0.0
    %492 = vmatprep.subr.mxu0 0.0
    %493 = vmatpush1.msra.mxu0 0.0
    %494 = vmatprep.mubr.f32.mxu0 0.0
    %v495 = vand.u32 %v406, 4294901760
    %v496 = vsub.f32 %v406, %v495
    %v497 = vand.u32 %v496, 4294901760
    %v498 = vsub.f32 %v496, %v497
    %v499 = vand.u32 %v498, 4294901760
    %500 = vmatmul.mubr.f32.gmra.mrb[0].mxu0 %v499
    %v501 = vpop.f32.mrb[0].mxu0
    %v502 = vadd.f32 %v402, %v501
    %v503 = vpop.f32.mrb[0].mxu0
    %v504 = vadd.f32 %v402, %v503
    %505 = vdwg.mxu0
    %v506 = vand.u32 %v383, 4294901760
    %v507 = vsub.f32 %v383, %v506
    %v508 = vand.u32 %v507, 4294901760
    %v509 = vsub.f32 %v507, %v508
    %v510 = vand.u32 %v509, 4294901760
    %511 = vmatprep.subr.mxu0 %v510
    %v512 = vand.u32 %v382, 4294901760
    %v513 = vsub.f32 %v382, %v512
    %v514 = vand.u32 %v513, 4294901760
    %v515 = vsub.f32 %v513, %v514
    %v516 = vand.u32 %v515, 4294901760
    %517 = vmatpush1.msra.mxu0 %v516
    %v518 = vand.u32 %v387, 4294901760
    %v519 = vsub.f32 %v387, %v518
    %v520 = vand.u32 %v519, 4294901760
    %v521 = vsub.f32 %v519, %v520
    %v522 = vand.u32 %v521, 4294901760
    %523 = vmatprep.subr.mxu0 %v522
    %v524 = vand.u32 %v386, 4294901760
    %v525 = vsub.f32 %v386, %v524
    %v526 = vand.u32 %v525, 4294901760
    %v527 = vsub.f32 %v525, %v526
    %v528 = vand.u32 %v527, 4294901760
    %529 = vmatpush1.msra.mxu0 %v528
    %v530 = vand.u32 %v391, 4294901760
    %v531 = vsub.f32 %v391, %v530
    %v532 = vand.u32 %v531, 4294901760
    %v533 = vsub.f32 %v531, %v532
    %v534 = vand.u32 %v533, 4294901760
    %535 = vmatprep.subr.mxu0 %v534
    %v536 = vand.u32 %v390, 4294901760
    %v537 = vsub.f32 %v390, %v536
    %v538 = vand.u32 %v537, 4294901760
    %v539 = vsub.f32 %v537, %v538
    %v540 = vand.u32 %v539, 4294901760
    %541 = vmatpush1.msra.mxu0 %v540
    %v542 = vand.u32 %v395, 4294901760
    %v543 = vsub.f32 %v395, %v542
    %v544 = vand.u32 %v543, 4294901760
    %v545 = vsub.f32 %v543, %v544
    %v546 = vand.u32 %v545, 4294901760
    %547 = vmatprep.subr.mxu0 %v546
    %v548 = vand.u32 %v394, 4294901760
    %v549 = vsub.f32 %v394, %v548
    %v550 = vand.u32 %v549, 4294901760
    %v551 = vsub.f32 %v549, %v550
    %v552 = vand.u32 %v551, 4294901760
    %553 = vmatpush1.msra.mxu0 %v552
    %v554 = vand.u32 %v412, 4294901760
    %v555 = vsub.f32 %v412, %v554
    %v556 = vand.u32 %v555, 4294901760
    %v557 = vsub.f32 %v555, %v556
    %v558 = vand.u32 %v557, 4294901760
    %559 = vmatprep.subr.mxu0 %v558
    %v560 = vand.u32 %v409, 4294901760
    %v561 = vsub.f32 %v409, %v560
    %v562 = vand.u32 %v561, 4294901760
    %v563 = vsub.f32 %v561, %v562
    %v564 = vand.u32 %v563, 4294901760
    %565 = vmatpush1.msra.mxu0 %v564
    %566 = vmatprep.subr.mxu0 0.0
    %567 = vmatpush1.msra.mxu0 0.0
    %568 = vmatprep.subr.mxu0 0.0
    %569 = vmatpush1.msra.mxu0 0.0
    %570 = vmatprep.subr.mxu0 0.0
    %571 = vmatpush1.msra.mxu0 0.0
    %572 = vmatprep.subr.mxu0 0.0
    %573 = vmatpush1.msra.mxu0 0.0
    %574 = vmatprep.subr.mxu0 0.0
    %575 = vmatpush1.msra.mxu0 0.0
    %576 = vmatprep.subr.mxu0 0.0
    %577 = vmatpush1.msra.mxu0 0.0
    %578 = vmatprep.subr.mxu0 0.0
    %579 = vmatpush1.msra.mxu0 0.0
    %580 = vmatprep.subr.mxu0 0.0
    %581 = vmatpush1.msra.mxu0 0.0
    %582 = vmatprep.subr.mxu0 0.0
    %583 = vmatpush1.msra.mxu0 0.0
    %584 = vmatprep.subr.mxu0 0.0
    %585 = vmatpush1.msra.mxu0 0.0
    %586 = vmatprep.subr.mxu0 0.0
    %587 = vmatpush1.msra.mxu0 0.0
    %588 = vmatprep.subr.mxu0 0.0
    %589 = vmatpush1.msra.mxu0 0.0
    %590 = vmatprep.subr.mxu0 0.0
    %591 = vmatpush1.msra.mxu0 0.0
    %592 = vmatprep.subr.mxu0 0.0
    %593 = vmatpush1.msra.mxu0 0.0
    %594 = vmatprep.subr.mxu0 0.0
    %595 = vmatpush1.msra.mxu0 0.0
    %596 = vmatprep.subr.mxu0 0.0
    %597 = vmatpush1.msra.mxu0 0.0
    %598 = vmatprep.subr.mxu0 0.0
    %599 = vmatpush1.msra.mxu0 0.0
    %600 = vmatprep.subr.mxu0 0.0
    %601 = vmatpush1.msra.mxu0 0.0
    %602 = vmatprep.subr.mxu0 0.0
    %603 = vmatpush1.msra.mxu0 0.0
    %604 = vmatprep.subr.mxu0 0.0
    %605 = vmatpush1.msra.mxu0 0.0
    %606 = vmatprep.subr.mxu0 0.0
    %607 = vmatpush1.msra.mxu0 0.0
    %608 = vmatprep.subr.mxu0 0.0
    %609 = vmatpush1.msra.mxu0 0.0
    %610 = vmatprep.subr.mxu0 0.0
    %611 = vmatpush1.msra.mxu0 0.0
    %612 = vmatprep.subr.mxu0 0.0
    %613 = vmatpush1.msra.mxu0 0.0
    %614 = vmatprep.subr.mxu0 0.0
    %615 = vmatpush1.msra.mxu0 0.0
    %616 = vmatprep.subr.mxu0 0.0
    %617 = vmatpush1.msra.mxu0 0.0
    %618 = vmatprep.subr.mxu0 0.0
    %619 = vmatpush1.msra.mxu0 0.0
    %620 = vmatprep.mubr.f32.mxu0 0.0
    %v621 = vand.u32 %v406, 4294901760
    %622 = vmatmul.mubr.f32.gmra.mrb[0].mxu0 %v621
    %v623 = vpop.f32.mrb[0].mxu0
    %v624 = vadd.f32 %v502, %v623
    %v625 = vpop.f32.mrb[0].mxu0
    %v626 = vadd.f32 %v504, %v625
    %627 = vdwg.mxu0
    %v628 = vand.u32 %v383, 4294901760
    %v629 = vsub.f32 %v383, %v628
    %630 = vmatprep.subr.mxu0 %v629
    %v631 = vand.u32 %v382, 4294901760
    %v632 = vsub.f32 %v382, %v631
    %633 = vmatpush1.msra.mxu0 %v632
    %v634 = vand.u32 %v387, 4294901760
    %v635 = vsub.f32 %v387, %v634
    %636 = vmatprep.subr.mxu0 %v635
    %v637 = vand.u32 %v386, 4294901760
    %v638 = vsub.f32 %v386, %v637
    %639 = vmatpush1.msra.mxu0 %v638
    %v640 = vand.u32 %v391, 4294901760
    %v641 = vsub.f32 %v391, %v640
    %642 = vmatprep.subr.mxu0 %v641
    %v643 = vand.u32 %v390, 4294901760
    %v644 = vsub.f32 %v390, %v643
    %645 = vmatpush1.msra.mxu0 %v644
    %v646 = vand.u32 %v395, 4294901760
    %v647 = vsub.f32 %v395, %v646
    %648 = vmatprep.subr.mxu0 %v647
    %v649 = vand.u32 %v394, 4294901760
    %v650 = vsub.f32 %v394, %v649
    %651 = vmatpush1.msra.mxu0 %v650
    %v652 = vand.u32 %v412, 4294901760
    %v653 = vsub.f32 %v412, %v652
    %654 = vmatprep.subr.mxu0 %v653
    %v655 = vand.u32 %v409, 4294901760
    %v656 = vsub.f32 %v409, %v655
    %657 = vmatpush1.msra.mxu0 %v656
    %658 = vmatprep.subr.mxu0 0.0
    %659 = vmatpush1.msra.mxu0 0.0
    %660 = vmatprep.subr.mxu0 0.0
    %661 = vmatpush1.msra.mxu0 0.0
    %662 = vmatprep.subr.mxu0 0.0
    %663 = vmatpush1.msra.mxu0 0.0
    %664 = vmatprep.subr.mxu0 0.0
    %665 = vmatpush1.msra.mxu0 0.0
    %666 = vmatprep.subr.mxu0 0.0
    %667 = vmatpush1.msra.mxu0 0.0
    %668 = vmatprep.subr.mxu0 0.0
    %669 = vmatpush1.msra.mxu0 0.0
    %670 = vmatprep.subr.mxu0 0.0
    %671 = vmatpush1.msra.mxu0 0.0
    %672 = vmatprep.subr.mxu0 0.0
    %673 = vmatpush1.msra.mxu0 0.0
    %674 = vmatprep.subr.mxu0 0.0
    %675 = vmatpush1.msra.mxu0 0.0
    %676 = vmatprep.subr.mxu0 0.0
    %677 = vmatpush1.msra.mxu0 0.0
    %678 = vmatprep.subr.mxu0 0.0
    %679 = vmatpush1.msra.mxu0 0.0
    %680 = vmatprep.subr.mxu0 0.0
    %681 = vmatpush1.msra.mxu0 0.0
    %682 = vmatprep.subr.mxu0 0.0
    %683 = vmatpush1.msra.mxu0 0.0
    %684 = vmatprep.subr.mxu0 0.0
    %685 = vmatpush1.msra.mxu0 0.0
    %686 = vmatprep.subr.mxu0 0.0
    %687 = vmatpush1.msra.mxu0 0.0
    %688 = vmatprep.subr.mxu0 0.0
    %689 = vmatpush1.msra.mxu0 0.0
    %690 = vmatprep.subr.mxu0 0.0
    %691 = vmatpush1.msra.mxu0 0.0
    %692 = vmatprep.subr.mxu0 0.0
    %693 = vmatpush1.msra.mxu0 0.0
    %694 = vmatprep.subr.mxu0 0.0
    %695 = vmatpush1.msra.mxu0 0.0
    %696 = vmatprep.subr.mxu0 0.0
    %697 = vmatpush1.msra.mxu0 0.0
    %698 = vmatprep.subr.mxu0 0.0
    %699 = vmatpush1.msra.mxu0 0.0
    %700 = vmatprep.subr.mxu0 0.0
    %701 = vmatpush1.msra.mxu0 0.0
    %702 = vmatprep.subr.mxu0 0.0
    %703 = vmatpush1.msra.mxu0 0.0
    %704 = vmatprep.subr.mxu0 0.0
    %705 = vmatpush1.msra.mxu0 0.0
    %706 = vmatprep.subr.mxu0 0.0
    %707 = vmatpush1.msra.mxu0 0.0
    %708 = vmatprep.subr.mxu0 0.0
    %709 = vmatpush1.msra.mxu0 0.0
    %710 = vmatprep.subr.mxu0 0.0
    %711 = vmatpush1.msra.mxu0 0.0
    %712 = vmatprep.mubr.f32.mxu0 0.0
    %v713 = vand.u32 %v406, 4294901760
    %v714 = vsub.f32 %v406, %v713
    %715 = vmatmul.mubr.f32.gmra.mrb[0].mxu0 %v714
    %v716 = vpop.f32.mrb[0].mxu0
    %v717 = vadd.f32 %v624, %v716
    %v718 = vpop.f32.mrb[0].mxu0
    %v719 = vadd.f32 %v626, %v718
    %720 = vdwg.mxu0
    %v721 = vand.u32 %v383, 4294901760
    %722 = vmatprep.subr.mxu0 %v721
    %v723 = vand.u32 %v382, 4294901760
    %724 = vmatpush1.msra.mxu0 %v723
    %v725 = vand.u32 %v387, 4294901760
    %726 = vmatprep.subr.mxu0 %v725
    %v727 = vand.u32 %v386, 4294901760
    %728 = vmatpush1.msra.mxu0 %v727
    %v729 = vand.u32 %v391, 4294901760
    %730 = vmatprep.subr.mxu0 %v729
    %v731 = vand.u32 %v390, 4294901760
    %732 = vmatpush1.msra.mxu0 %v731
    %v733 = vand.u32 %v395, 4294901760
    %734 = vmatprep.subr.mxu0 %v733
    %v735 = vand.u32 %v394, 4294901760
    %736 = vmatpush1.msra.mxu0 %v735
    %v737 = vand.u32 %v412, 4294901760
    %738 = vmatprep.subr.mxu0 %v737
    %v739 = vand.u32 %v409, 4294901760
    %740 = vmatpush1.msra.mxu0 %v739
    %741 = vmatprep.subr.mxu0 0.0
    %742 = vmatpush1.msra.mxu0 0.0
    %743 = vmatprep.subr.mxu0 0.0
    %744 = vmatpush1.msra.mxu0 0.0
    %745 = vmatprep.subr.mxu0 0.0
    %746 = vmatpush1.msra.mxu0 0.0
    %747 = vmatprep.subr.mxu0 0.0
    %748 = vmatpush1.msra.mxu0 0.0
    %749 = vmatprep.subr.mxu0 0.0
    %750 = vmatpush1.msra.mxu0 0.0
    %751 = vmatprep.subr.mxu0 0.0
    %752 = vmatpush1.msra.mxu0 0.0
    %753 = vmatprep.subr.mxu0 0.0
    %754 = vmatpush1.msra.mxu0 0.0
    %755 = vmatprep.subr.mxu0 0.0
    %756 = vmatpush1.msra.mxu0 0.0
    %757 = vmatprep.subr.mxu0 0.0
    %758 = vmatpush1.msra.mxu0 0.0
    %759 = vmatprep.subr.mxu0 0.0
    %760 = vmatpush1.msra.mxu0 0.0
    %761 = vmatprep.subr.mxu0 0.0
    %762 = vmatpush1.msra.mxu0 0.0
    %763 = vmatprep.subr.mxu0 0.0
    %764 = vmatpush1.msra.mxu0 0.0
    %765 = vmatprep.subr.mxu0 0.0
    %766 = vmatpush1.msra.mxu0 0.0
    %767 = vmatprep.subr.mxu0 0.0
    %768 = vmatpush1.msra.mxu0 0.0
    %769 = vmatprep.subr.mxu0 0.0
    %770 = vmatpush1.msra.mxu0 0.0
    %771 = vmatprep.subr.mxu0 0.0
    %772 = vmatpush1.msra.mxu0 0.0
    %773 = vmatprep.subr.mxu0 0.0
    %774 = vmatpush1.msra.mxu0 0.0
    %775 = vmatprep.subr.mxu0 0.0
    %776 = vmatpush1.msra.mxu0 0.0
    %777 = vmatprep.subr.mxu0 0.0
    %778 = vmatpush1.msra.mxu0 0.0
    %779 = vmatprep.subr.mxu0 0.0
    %780 = vmatpush1.msra.mxu0 0.0
    %781 = vmatprep.subr.mxu0 0.0
    %782 = vmatpush1.msra.mxu0 0.0
    %783 = vmatprep.subr.mxu0 0.0
    %784 = vmatpush1.msra.mxu0 0.0
    %785 = vmatprep.subr.mxu0 0.0
    %786 = vmatpush1.msra.mxu0 0.0
    %787 = vmatprep.subr.mxu0 0.0
    %788 = vmatpush1.msra.mxu0 0.0
    %789 = vmatprep.subr.mxu0 0.0
    %790 = vmatpush1.msra.mxu0 0.0
    %791 = vmatprep.subr.mxu0 0.0
    %792 = vmatpush1.msra.mxu0 0.0
    %793 = vmatprep.subr.mxu0 0.0
    %794 = vmatpush1.msra.mxu0 0.0
    %795 = vmatprep.mubr.f32.mxu0 0.0
    %v796 = vand.u32 %v406, 4294901760
    %v797 = vsub.f32 %v406, %v796
    %v798 = vand.u32 %v797, 4294901760
    %799 = vmatmul.mubr.f32.gmra.mrb[0].mxu0 %v798
    %v800 = vpop.f32.mrb[0].mxu0
    %v801 = vadd.f32 %v717, %v800
    %v802 = vpop.f32.mrb[0].mxu0
    %v803 = vadd.f32 %v719, %v802
    %804 = vdwg.mxu0
    %v805 = vand.u32 %v383, 4294901760
    %v806 = vsub.f32 %v383, %v805
    %v807 = vand.u32 %v806, 4294901760
    %808 = vmatprep.subr.mxu0 %v807
    %v809 = vand.u32 %v382, 4294901760
    %v810 = vsub.f32 %v382, %v809
    %v811 = vand.u32 %v810, 4294901760
    %812 = vmatpush1.msra.mxu0 %v811
    %v813 = vand.u32 %v387, 4294901760
    %v814 = vsub.f32 %v387, %v813
    %v815 = vand.u32 %v814, 4294901760
    %816 = vmatprep.subr.mxu0 %v815
    %v817 = vand.u32 %v386, 4294901760
    %v818 = vsub.f32 %v386, %v817
    %v819 = vand.u32 %v818, 4294901760
    %820 = vmatpush1.msra.mxu0 %v819
    %v821 = vand.u32 %v391, 4294901760
    %v822 = vsub.f32 %v391, %v821
    %v823 = vand.u32 %v822, 4294901760
    %824 = vmatprep.subr.mxu0 %v823
    %v825 = vand.u32 %v390, 4294901760
    %v826 = vsub.f32 %v390, %v825
    %v827 = vand.u32 %v826, 4294901760
    %828 = vmatpush1.msra.mxu0 %v827
    %v829 = vand.u32 %v395, 4294901760
    %v830 = vsub.f32 %v395, %v829
    %v831 = vand.u32 %v830, 4294901760
    %832 = vmatprep.subr.mxu0 %v831
    %v833 = vand.u32 %v394, 4294901760
    %v834 = vsub.f32 %v394, %v833
    %v835 = vand.u32 %v834, 4294901760
    %836 = vmatpush1.msra.mxu0 %v835
    %v837 = vand.u32 %v412, 4294901760
    %v838 = vsub.f32 %v412, %v837
    %v839 = vand.u32 %v838, 4294901760
    %840 = vmatprep.subr.mxu0 %v839
    %v841 = vand.u32 %v409, 4294901760
    %v842 = vsub.f32 %v409, %v841
    %v843 = vand.u32 %v842, 4294901760
    %844 = vmatpush1.msra.mxu0 %v843
    %845 = vmatprep.subr.mxu0 0.0
    %846 = vmatpush1.msra.mxu0 0.0
    %847 = vmatprep.subr.mxu0 0.0
    %848 = vmatpush1.msra.mxu0 0.0
    %849 = vmatprep.subr.mxu0 0.0
    %850 = vmatpush1.msra.mxu0 0.0
    %851 = vmatprep.subr.mxu0 0.0
    %852 = vmatpush1.msra.mxu0 0.0
    %853 = vmatprep.subr.mxu0 0.0
    %854 = vmatpush1.msra.mxu0 0.0
    %855 = vmatprep.subr.mxu0 0.0
    %856 = vmatpush1.msra.mxu0 0.0
    %857 = vmatprep.subr.mxu0 0.0
    %858 = vmatpush1.msra.mxu0 0.0
    %859 = vmatprep.subr.mxu0 0.0
    %860 = vmatpush1.msra.mxu0 0.0
    %861 = vmatprep.subr.mxu0 0.0
    %862 = vmatpush1.msra.mxu0 0.0
    %863 = vmatprep.subr.mxu0 0.0
    %864 = vmatpush1.msra.mxu0 0.0
    %865 = vmatprep.subr.mxu0 0.0
    %866 = vmatpush1.msra.mxu0 0.0
    %867 = vmatprep.subr.mxu0 0.0
    %868 = vmatpush1.msra.mxu0 0.0
    %869 = vmatprep.subr.mxu0 0.0
    %870 = vmatpush1.msra.mxu0 0.0
    %871 = vmatprep.subr.mxu0 0.0
    %872 = vmatpush1.msra.mxu0 0.0
    %873 = vmatprep.subr.mxu0 0.0
    %874 = vmatpush1.msra.mxu0 0.0
    %875 = vmatprep.subr.mxu0 0.0
    %876 = vmatpush1.msra.mxu0 0.0
    %877 = vmatprep.subr.mxu0 0.0
    %878 = vmatpush1.msra.mxu0 0.0
    %879 = vmatprep.subr.mxu0 0.0
    %880 = vmatpush1.msra.mxu0 0.0
    %881 = vmatprep.subr.mxu0 0.0
    %882 = vmatpush1.msra.mxu0 0.0
    %883 = vmatprep.subr.mxu0 0.0
    %884 = vmatpush1.msra.mxu0 0.0
    %885 = vmatprep.subr.mxu0 0.0
    %886 = vmatpush1.msra.mxu0 0.0
    %887 = vmatprep.subr.mxu0 0.0
    %888 = vmatpush1.msra.mxu0 0.0
    %889 = vmatprep.subr.mxu0 0.0
    %890 = vmatpush1.msra.mxu0 0.0
    %891 = vmatprep.subr.mxu0 0.0
    %892 = vmatpush1.msra.mxu0 0.0
    %893 = vmatprep.subr.mxu0 0.0
    %894 = vmatpush1.msra.mxu0 0.0
    %895 = vmatprep.subr.mxu0 0.0
    %896 = vmatpush1.msra.mxu0 0.0
    %897 = vmatprep.subr.mxu0 0.0
    %898 = vmatpush1.msra.mxu0 0.0
    %899 = vmatprep.mubr.f32.mxu0 0.0
    %v900 = vand.u32 %v406, 4294901760
    %901 = vmatmul.mubr.f32.gmra.mrb[0].mxu0 %v900
    %v902 = vpop.f32.mrb[0].mxu0
    %v903 = vadd.f32 %v801, %v902
    %v904 = vpop.f32.mrb[0].mxu0
    %v905 = vadd.f32 %v803, %v904
    %906 = vdwg.mxu0
    %v907 = vand.u32 %v383, 4294901760
    %908 = vmatprep.subr.mxu0 %v907
    %v909 = vand.u32 %v382, 4294901760
    %910 = vmatpush1.msra.mxu0 %v909
    %v911 = vand.u32 %v387, 4294901760
    %912 = vmatprep.subr.mxu0 %v911
    %v913 = vand.u32 %v386, 4294901760
    %914 = vmatpush1.msra.mxu0 %v913
    %v915 = vand.u32 %v391, 4294901760
    %916 = vmatprep.subr.mxu0 %v915
    %v917 = vand.u32 %v390, 4294901760
    %918 = vmatpush1.msra.mxu0 %v917
    %v919 = vand.u32 %v395, 4294901760
    %920 = vmatprep.subr.mxu0 %v919
    %v921 = vand.u32 %v394, 4294901760
    %922 = vmatpush1.msra.mxu0 %v921
    %v923 = vand.u32 %v412, 4294901760
    %924 = vmatprep.subr.mxu0 %v923
    %v925 = vand.u32 %v409, 4294901760
    %926 = vmatpush1.msra.mxu0 %v925
    %927 = vmatprep.subr.mxu0 0.0
    %928 = vmatpush1.msra.mxu0 0.0
    %929 = vmatprep.subr.mxu0 0.0
    %930 = vmatpush1.msra.mxu0 0.0
    %931 = vmatprep.subr.mxu0 0.0
    %932 = vmatpush1.msra.mxu0 0.0
    %933 = vmatprep.subr.mxu0 0.0
    %934 = vmatpush1.msra.mxu0 0.0
    %935 = vmatprep.subr.mxu0 0.0
    %936 = vmatpush1.msra.mxu0 0.0
    %937 = vmatprep.subr.mxu0 0.0
    %938 = vmatpush1.msra.mxu0 0.0
    %939 = vmatprep.subr.mxu0 0.0
    %940 = vmatpush1.msra.mxu0 0.0
    %941 = vmatprep.subr.mxu0 0.0
    %942 = vmatpush1.msra.mxu0 0.0
    %943 = vmatprep.subr.mxu0 0.0
    %944 = vmatpush1.msra.mxu0 0.0
    %945 = vmatprep.subr.mxu0 0.0
    %946 = vmatpush1.msra.mxu0 0.0
    %947 = vmatprep.subr.mxu0 0.0
    %948 = vmatpush1.msra.mxu0 0.0
    %949 = vmatprep.subr.mxu0 0.0
    %950 = vmatpush1.msra.mxu0 0.0
    %951 = vmatprep.subr.mxu0 0.0
    %952 = vmatpush1.msra.mxu0 0.0
    %953 = vmatprep.subr.mxu0 0.0
    %954 = vmatpush1.msra.mxu0 0.0
    %955 = vmatprep.subr.mxu0 0.0
    %956 = vmatpush1.msra.mxu0 0.0
    %957 = vmatprep.subr.mxu0 0.0
    %958 = vmatpush1.msra.mxu0 0.0
    %959 = vmatprep.subr.mxu0 0.0
    %960 = vmatpush1.msra.mxu0 0.0
    %961 = vmatprep.subr.mxu0 0.0
    %962 = vmatpush1.msra.mxu0 0.0
    %963 = vmatprep.subr.mxu0 0.0
    %964 = vmatpush1.msra.mxu0 0.0
    %965 = vmatprep.subr.mxu0 0.0
    %966 = vmatpush1.msra.mxu0 0.0
    %967 = vmatprep.subr.mxu0 0.0
    %968 = vmatpush1.msra.mxu0 0.0
    %969 = vmatprep.subr.mxu0 0.0
    %970 = vmatpush1.msra.mxu0 0.0
    %971 = vmatprep.subr.mxu0 0.0
    %972 = vmatpush1.msra.mxu0 0.0
    %973 = vmatprep.subr.mxu0 0.0
    %974 = vmatpush1.msra.mxu0 0.0
    %975 = vmatprep.subr.mxu0 0.0
    %976 = vmatpush1.msra.mxu0 0.0
    %977 = vmatprep.subr.mxu0 0.0
    %978 = vmatpush1.msra.mxu0 0.0
    %979 = vmatprep.subr.mxu0 0.0
    %980 = vmatpush1.msra.mxu0 0.0
    %981 = vmatprep.mubr.f32.mxu0 0.0
    %v982 = vand.u32 %v406, 4294901760
    %983 = vmatmul.mubr.f32.gmra.mrb[0].mxu0 %v982
    %v984 = vpop.f32.mrb[0].mxu0
    %v985 = vadd.f32 %v903, %v984
    %v986 = vpop.f32.mrb[0].mxu0
    %v987 = vadd.f32 %v905, %v986
    %988 = vdwg.mxu0
    %v989 = vand.u32 %v385, 4294901760
    %990 = vmatprep.subr.mxu0 %v989
    %v991 = vand.u32 %v384, 4294901760
    %992 = vmatpush1.msra.mxu0 %v991
    %v993 = vand.u32 %v389, 4294901760
    %994 = vmatprep.subr.mxu0 %v993
    %v995 = vand.u32 %v388, 4294901760
    %996 = vmatpush1.msra.mxu0 %v995
    %v997 = vand.u32 %v393, 4294901760
    %998 = vmatprep.subr.mxu0 %v997
    %v999 = vand.u32 %v392, 4294901760
    %1000 = vmatpush1.msra.mxu0 %v999
    %v1001 = vand.u32 %v397, 4294901760
    %1002 = vmatprep.subr.mxu0 %v1001
    %v1003 = vand.u32 %v396, 4294901760
    %1004 = vmatpush1.msra.mxu0 %v1003
    %v1005 = vand.u32 %v418, 4294901760
    %1006 = vmatprep.subr.mxu0 %v1005
    %v1007 = vand.u32 %v415, 4294901760
    %1008 = vmatpush1.msra.mxu0 %v1007
    %1009 = vmatprep.subr.mxu0 0.0
    %1010 = vmatpush1.msra.mxu0 0.0
    %1011 = vmatprep.subr.mxu0 0.0
    %1012 = vmatpush1.msra.mxu0 0.0
    %1013 = vmatprep.subr.mxu0 0.0
    %1014 = vmatpush1.msra.mxu0 0.0
    %1015 = vmatprep.subr.mxu0 0.0
    %1016 = vmatpush1.msra.mxu0 0.0
    %1017 = vmatprep.subr.mxu0 0.0
    %1018 = vmatpush1.msra.mxu0 0.0
    %1019 = vmatprep.subr.mxu0 0.0
    %1020 = vmatpush1.msra.mxu0 0.0
    %1021 = vmatprep.subr.mxu0 0.0
    %1022 = vmatpush1.msra.mxu0 0.0
    %1023 = vmatprep.subr.mxu0 0.0
    %1024 = vmatpush1.msra.mxu0 0.0
    %1025 = vmatprep.subr.mxu0 0.0
    %1026 = vmatpush1.msra.mxu0 0.0
    %1027 = vmatprep.subr.mxu0 0.0
    %1028 = vmatpush1.msra.mxu0 0.0
    %1029 = vmatprep.subr.mxu0 0.0
    %1030 = vmatpush1.msra.mxu0 0.0
    %1031 = vmatprep.subr.mxu0 0.0
    %1032 = vmatpush1.msra.mxu0 0.0
    %1033 = vmatprep.subr.mxu0 0.0
    %1034 = vmatpush1.msra.mxu0 0.0
    %1035 = vmatprep.subr.mxu0 0.0
    %1036 = vmatpush1.msra.mxu0 0.0
    %1037 = vmatprep.subr.mxu0 0.0
    %1038 = vmatpush1.msra.mxu0 0.0
    %1039 = vmatprep.subr.mxu0 0.0
    %1040 = vmatpush1.msra.mxu0 0.0
    %1041 = vmatprep.subr.mxu0 0.0
    %1042 = vmatpush1.msra.mxu0 0.0
    %1043 = vmatprep.subr.mxu0 0.0
    %1044 = vmatpush1.msra.mxu0 0.0
    %1045 = vmatprep.subr.mxu0 0.0
    %1046 = vmatpush1.msra.mxu0 0.0
    %1047 = vmatprep.subr.mxu0 0.0
    %1048 = vmatpush1.msra.mxu0 0.0
    %1049 = vmatprep.subr.mxu0 0.0
    %1050 = vmatpush1.msra.mxu0 0.0
    %1051 = vmatprep.subr.mxu0 0.0
    %1052 = vmatpush1.msra.mxu0 0.0
    %1053 = vmatprep.subr.mxu0 0.0
    %1054 = vmatpush1.msra.mxu0 0.0
    %1055 = vmatprep.subr.mxu0 0.0
    %1056 = vmatpush1.msra.mxu0 0.0
    %1057 = vmatprep.subr.mxu0 0.0
    %1058 = vmatpush1.msra.mxu0 0.0
    %1059 = vmatprep.subr.mxu0 0.0
    %1060 = vmatpush1.msra.mxu0 0.0
    %1061 = vmatprep.subr.mxu0 0.0
    %1062 = vmatpush1.msra.mxu0 0.0
    %1063 = vmatprep.mubr.f32.mxu0 0.0
    %v1064 = vand.u32 %v406, 4294901760
    %v1065 = vsub.f32 %v406, %v1064
    %v1066 = vand.u32 %v1065, 4294901760
    %v1067 = vsub.f32 %v1065, %v1066
    %v1068 = vand.u32 %v1067, 4294901760
    %1069 = vmatmul.mubr.f32.gmra.mrb[0].mxu0 %v1068
    %v1070 = vpop.f32.mrb[0].mxu0
    %v1071 = vadd.f32 %v402, %v1070
    %v1072 = vpop.f32.mrb[0].mxu0
    %v1073 = vadd.f32 %v402, %v1072
    %1074 = vdwg.mxu0
    %v1075 = vand.u32 %v385, 4294901760
    %v1076 = vsub.f32 %v385, %v1075
    %v1077 = vand.u32 %v1076, 4294901760
    %v1078 = vsub.f32 %v1076, %v1077
    %v1079 = vand.u32 %v1078, 4294901760
    %1080 = vmatprep.subr.mxu0 %v1079
    %v1081 = vand.u32 %v384, 4294901760
    %v1082 = vsub.f32 %v384, %v1081
    %v1083 = vand.u32 %v1082, 4294901760
    %v1084 = vsub.f32 %v1082, %v1083
    %v1085 = vand.u32 %v1084, 4294901760
    %1086 = vmatpush1.msra.mxu0 %v1085
    %v1087 = vand.u32 %v389, 4294901760
    %v1088 = vsub.f32 %v389, %v1087
    %v1089 = vand.u32 %v1088, 4294901760
    %v1090 = vsub.f32 %v1088, %v1089
    %v1091 = vand.u32 %v1090, 4294901760
    %1092 = vmatprep.subr.mxu0 %v1091
    %v1093 = vand.u32 %v388, 4294901760
    %v1094 = vsub.f32 %v388, %v1093
    %v1095 = vand.u32 %v1094, 4294901760
    %v1096 = vsub.f32 %v1094, %v1095
    %v1097 = vand.u32 %v1096, 4294901760
    %1098 = vmatpush1.msra.mxu0 %v1097
    %v1099 = vand.u32 %v393, 4294901760
    %v1100 = vsub.f32 %v393, %v1099
    %v1101 = vand.u32 %v1100, 4294901760
    %v1102 = vsub.f32 %v1100, %v1101
    %v1103 = vand.u32 %v1102, 4294901760
    %1104 = vmatprep.subr.mxu0 %v1103
    %v1105 = vand.u32 %v392, 4294901760
    %v1106 = vsub.f32 %v392, %v1105
    %v1107 = vand.u32 %v1106, 4294901760
    %v1108 = vsub.f32 %v1106, %v1107
    %v1109 = vand.u32 %v1108, 4294901760
    %1110 = vmatpush1.msra.mxu0 %v1109
    %v1111 = vand.u32 %v397, 4294901760
    %v1112 = vsub.f32 %v397, %v1111
    %v1113 = vand.u32 %v1112, 4294901760
    %v1114 = vsub.f32 %v1112, %v1113
    %v1115 = vand.u32 %v1114, 4294901760
    %1116 = vmatprep.subr.mxu0 %v1115
    %v1117 = vand.u32 %v396, 4294901760
    %v1118 = vsub.f32 %v396, %v1117
    %v1119 = vand.u32 %v1118, 4294901760
    %v1120 = vsub.f32 %v1118, %v1119
    %v1121 = vand.u32 %v1120, 4294901760
    %1122 = vmatpush1.msra.mxu0 %v1121
    %v1123 = vand.u32 %v418, 4294901760
    %v1124 = vsub.f32 %v418, %v1123
    %v1125 = vand.u32 %v1124, 4294901760
    %v1126 = vsub.f32 %v1124, %v1125
    %v1127 = vand.u32 %v1126, 4294901760
    %1128 = vmatprep.subr.mxu0 %v1127
    %v1129 = vand.u32 %v415, 4294901760
    %v1130 = vsub.f32 %v415, %v1129
    %v1131 = vand.u32 %v1130, 4294901760
    %v1132 = vsub.f32 %v1130, %v1131
    %v1133 = vand.u32 %v1132, 4294901760
    %1134 = vmatpush1.msra.mxu0 %v1133
    %1135 = vmatprep.subr.mxu0 0.0
    %1136 = vmatpush1.msra.mxu0 0.0
    %1137 = vmatprep.subr.mxu0 0.0
    %1138 = vmatpush1.msra.mxu0 0.0
    %1139 = vmatprep.subr.mxu0 0.0
    %1140 = vmatpush1.msra.mxu0 0.0
    %1141 = vmatprep.subr.mxu0 0.0
    %1142 = vmatpush1.msra.mxu0 0.0
    %1143 = vmatprep.subr.mxu0 0.0
    %1144 = vmatpush1.msra.mxu0 0.0
    %1145 = vmatprep.subr.mxu0 0.0
    %1146 = vmatpush1.msra.mxu0 0.0
    %1147 = vmatprep.subr.mxu0 0.0
    %1148 = vmatpush1.msra.mxu0 0.0
    %1149 = vmatprep.subr.mxu0 0.0
    %1150 = vmatpush1.msra.mxu0 0.0
    %1151 = vmatprep.subr.mxu0 0.0
    %1152 = vmatpush1.msra.mxu0 0.0
    %1153 = vmatprep.subr.mxu0 0.0
    %1154 = vmatpush1.msra.mxu0 0.0
    %1155 = vmatprep.subr.mxu0 0.0
    %1156 = vmatpush1.msra.mxu0 0.0
    %1157 = vmatprep.subr.mxu0 0.0
    %1158 = vmatpush1.msra.mxu0 0.0
    %1159 = vmatprep.subr.mxu0 0.0
    %1160 = vmatpush1.msra.mxu0 0.0
    %1161 = vmatprep.subr.mxu0 0.0
    %1162 = vmatpush1.msra.mxu0 0.0
    %1163 = vmatprep.subr.mxu0 0.0
    %1164 = vmatpush1.msra.mxu0 0.0
    %1165 = vmatprep.subr.mxu0 0.0
    %1166 = vmatpush1.msra.mxu0 0.0
    %1167 = vmatprep.subr.mxu0 0.0
    %1168 = vmatpush1.msra.mxu0 0.0
    %1169 = vmatprep.subr.mxu0 0.0
    %1170 = vmatpush1.msra.mxu0 0.0
    %1171 = vmatprep.subr.mxu0 0.0
    %1172 = vmatpush1.msra.mxu0 0.0
    %1173 = vmatprep.subr.mxu0 0.0
    %1174 = vmatpush1.msra.mxu0 0.0
    %1175 = vmatprep.subr.mxu0 0.0
    %1176 = vmatpush1.msra.mxu0 0.0
    %1177 = vmatprep.subr.mxu0 0.0
    %1178 = vmatpush1.msra.mxu0 0.0
    %1179 = vmatprep.subr.mxu0 0.0
    %1180 = vmatpush1.msra.mxu0 0.0
    %1181 = vmatprep.subr.mxu0 0.0
    %1182 = vmatpush1.msra.mxu0 0.0
    %1183 = vmatprep.subr.mxu0 0.0
    %1184 = vmatpush1.msra.mxu0 0.0
    %1185 = vmatprep.subr.mxu0 0.0
    %1186 = vmatpush1.msra.mxu0 0.0
    %1187 = vmatprep.subr.mxu0 0.0
    %1188 = vmatpush1.msra.mxu0 0.0
    %1189 = vmatprep.mubr.f32.mxu0 0.0
    %v1190 = vand.u32 %v406, 4294901760
    %1191 = vmatmul.mubr.f32.gmra.mrb[0].mxu0 %v1190
    %v1192 = vpop.f32.mrb[0].mxu0
    %v1193 = vadd.f32 %v1071, %v1192
    %v1194 = vpop.f32.mrb[0].mxu0
    %v1195 = vadd.f32 %v1073, %v1194
    %1196 = vdwg.mxu0
    %v1197 = vand.u32 %v385, 4294901760
    %v1198 = vsub.f32 %v385, %v1197
    %1199 = vmatprep.subr.mxu0 %v1198
    %v1200 = vand.u32 %v384, 4294901760
    %v1201 = vsub.f32 %v384, %v1200
    %1202 = vmatpush1.msra.mxu0 %v1201
    %v1203 = vand.u32 %v389, 4294901760
    %v1204 = vsub.f32 %v389, %v1203
    %1205 = vmatprep.subr.mxu0 %v1204
    %v1206 = vand.u32 %v388, 4294901760
    %v1207 = vsub.f32 %v388, %v1206
    %1208 = vmatpush1.msra.mxu0 %v1207
    %v1209 = vand.u32 %v393, 4294901760
    %v1210 = vsub.f32 %v393, %v1209
    %1211 = vmatprep.subr.mxu0 %v1210
    %v1212 = vand.u32 %v392, 4294901760
    %v1213 = vsub.f32 %v392, %v1212
    %1214 = vmatpush1.msra.mxu0 %v1213
    %v1215 = vand.u32 %v397, 4294901760
    %v1216 = vsub.f32 %v397, %v1215
    %1217 = vmatprep.subr.mxu0 %v1216
    %v1218 = vand.u32 %v396, 4294901760
    %v1219 = vsub.f32 %v396, %v1218
    %1220 = vmatpush1.msra.mxu0 %v1219
    %v1221 = vand.u32 %v418, 4294901760
    %v1222 = vsub.f32 %v418, %v1221
    %1223 = vmatprep.subr.mxu0 %v1222
    %v1224 = vand.u32 %v415, 4294901760
    %v1225 = vsub.f32 %v415, %v1224
    %1226 = vmatpush1.msra.mxu0 %v1225
    %1227 = vmatprep.subr.mxu0 0.0
    %1228 = vmatpush1.msra.mxu0 0.0
    %1229 = vmatprep.subr.mxu0 0.0
    %1230 = vmatpush1.msra.mxu0 0.0
    %1231 = vmatprep.subr.mxu0 0.0
    %1232 = vmatpush1.msra.mxu0 0.0
    %1233 = vmatprep.subr.mxu0 0.0
    %1234 = vmatpush1.msra.mxu0 0.0
    %1235 = vmatprep.subr.mxu0 0.0
    %1236 = vmatpush1.msra.mxu0 0.0
    %1237 = vmatprep.subr.mxu0 0.0
    %1238 = vmatpush1.msra.mxu0 0.0
    %1239 = vmatprep.subr.mxu0 0.0
    %1240 = vmatpush1.msra.mxu0 0.0
    %1241 = vmatprep.subr.mxu0 0.0
    %1242 = vmatpush1.msra.mxu0 0.0
    %1243 = vmatprep.subr.mxu0 0.0
    %1244 = vmatpush1.msra.mxu0 0.0
    %1245 = vmatprep.subr.mxu0 0.0
    %1246 = vmatpush1.msra.mxu0 0.0
    %1247 = vmatprep.subr.mxu0 0.0
    %1248 = vmatpush1.msra.mxu0 0.0
    %1249 = vmatprep.subr.mxu0 0.0
    %1250 = vmatpush1.msra.mxu0 0.0
    %1251 = vmatprep.subr.mxu0 0.0
    %1252 = vmatpush1.msra.mxu0 0.0
    %1253 = vmatprep.subr.mxu0 0.0
    %1254 = vmatpush1.msra.mxu0 0.0
    %1255 = vmatprep.subr.mxu0 0.0
    %1256 = vmatpush1.msra.mxu0 0.0
    %1257 = vmatprep.subr.mxu0 0.0
    %1258 = vmatpush1.msra.mxu0 0.0
    %1259 = vmatprep.subr.mxu0 0.0
    %1260 = vmatpush1.msra.mxu0 0.0
    %1261 = vmatprep.subr.mxu0 0.0
    %1262 = vmatpush1.msra.mxu0 0.0
    %1263 = vmatprep.subr.mxu0 0.0
    %1264 = vmatpush1.msra.mxu0 0.0
    %1265 = vmatprep.subr.mxu0 0.0
    %1266 = vmatpush1.msra.mxu0 0.0
    %1267 = vmatprep.subr.mxu0 0.0
    %1268 = vmatpush1.msra.mxu0 0.0
    %1269 = vmatprep.subr.mxu0 0.0
    %1270 = vmatpush1.msra.mxu0 0.0
    %1271 = vmatprep.subr.mxu0 0.0
    %1272 = vmatpush1.msra.mxu0 0.0
    %1273 = vmatprep.subr.mxu0 0.0
    %1274 = vmatpush1.msra.mxu0 0.0
    %1275 = vmatprep.subr.mxu0 0.0
    %1276 = vmatpush1.msra.mxu0 0.0
    %1277 = vmatprep.subr.mxu0 0.0
    %1278 = vmatpush1.msra.mxu0 0.0
    %1279 = vmatprep.subr.mxu0 0.0
    %1280 = vmatpush1.msra.mxu0 0.0
    %1281 = vmatprep.mubr.f32.mxu0 0.0
    %v1282 = vand.u32 %v406, 4294901760
    %v1283 = vsub.f32 %v406, %v1282
    %1284 = vmatmul.mubr.f32.gmra.mrb[0].mxu0 %v1283
    %v1285 = vpop.f32.mrb[0].mxu0
    %v1286 = vadd.f32 %v1193, %v1285
    %v1287 = vpop.f32.mrb[0].mxu0
    %v1288 = vadd.f32 %v1195, %v1287
    %1289 = vdwg.mxu0
    %v1290 = vand.u32 %v385, 4294901760
    %1291 = vmatprep.subr.mxu0 %v1290
    %v1292 = vand.u32 %v384, 4294901760
    %1293 = vmatpush1.msra.mxu0 %v1292
    %v1294 = vand.u32 %v389, 4294901760
    %1295 = vmatprep.subr.mxu0 %v1294
    %v1296 = vand.u32 %v388, 4294901760
    %1297 = vmatpush1.msra.mxu0 %v1296
    %v1298 = vand.u32 %v393, 4294901760
    %1299 = vmatprep.subr.mxu0 %v1298
    %v1300 = vand.u32 %v392, 4294901760
    %1301 = vmatpush1.msra.mxu0 %v1300
    %v1302 = vand.u32 %v397, 4294901760
    %1303 = vmatprep.subr.mxu0 %v1302
    %v1304 = vand.u32 %v396, 4294901760
    %1305 = vmatpush1.msra.mxu0 %v1304
    %v1306 = vand.u32 %v418, 4294901760
    %1307 = vmatprep.subr.mxu0 %v1306
    %v1308 = vand.u32 %v415, 4294901760
    %1309 = vmatpush1.msra.mxu0 %v1308
    %1310 = vmatprep.subr.mxu0 0.0
    %1311 = vmatpush1.msra.mxu0 0.0
    %1312 = vmatprep.subr.mxu0 0.0
    %1313 = vmatpush1.msra.mxu0 0.0
    %1314 = vmatprep.subr.mxu0 0.0
    %1315 = vmatpush1.msra.mxu0 0.0
    %1316 = vmatprep.subr.mxu0 0.0
    %1317 = vmatpush1.msra.mxu0 0.0
    %1318 = vmatprep.subr.mxu0 0.0
    %1319 = vmatpush1.msra.mxu0 0.0
    %1320 = vmatprep.subr.mxu0 0.0
    %1321 = vmatpush1.msra.mxu0 0.0
    %1322 = vmatprep.subr.mxu0 0.0
    %1323 = vmatpush1.msra.mxu0 0.0
    %1324 = vmatprep.subr.mxu0 0.0
    %1325 = vmatpush1.msra.mxu0 0.0
    %1326 = vmatprep.subr.mxu0 0.0
    %1327 = vmatpush1.msra.mxu0 0.0
    %1328 = vmatprep.subr.mxu0 0.0
    %1329 = vmatpush1.msra.mxu0 0.0
    %1330 = vmatprep.subr.mxu0 0.0
    %1331 = vmatpush1.msra.mxu0 0.0
    %1332 = vmatprep.subr.mxu0 0.0
    %1333 = vmatpush1.msra.mxu0 0.0
    %1334 = vmatprep.subr.mxu0 0.0
    %1335 = vmatpush1.msra.mxu0 0.0
    %1336 = vmatprep.subr.mxu0 0.0
    %1337 = vmatpush1.msra.mxu0 0.0
    %1338 = vmatprep.subr.mxu0 0.0
    %1339 = vmatpush1.msra.mxu0 0.0
    %1340 = vmatprep.subr.mxu0 0.0
    %1341 = vmatpush1.msra.mxu0 0.0
    %1342 = vmatprep.subr.mxu0 0.0
    %1343 = vmatpush1.msra.mxu0 0.0
    %1344 = vmatprep.subr.mxu0 0.0
    %1345 = vmatpush1.msra.mxu0 0.0
    %1346 = vmatprep.subr.mxu0 0.0
    %1347 = vmatpush1.msra.mxu0 0.0
    %1348 = vmatprep.subr.mxu0 0.0
    %1349 = vmatpush1.msra.mxu0 0.0
    %1350 = vmatprep.subr.mxu0 0.0
    %1351 = vmatpush1.msra.mxu0 0.0
    %1352 = vmatprep.subr.mxu0 0.0
    %1353 = vmatpush1.msra.mxu0 0.0
    %1354 = vmatprep.subr.mxu0 0.0
    %1355 = vmatpush1.msra.mxu0 0.0
    %1356 = vmatprep.subr.mxu0 0.0
    %1357 = vmatpush1.msra.mxu0 0.0
    %1358 = vmatprep.subr.mxu0 0.0
    %1359 = vmatpush1.msra.mxu0 0.0
    %1360 = vmatprep.subr.mxu0 0.0
    %1361 = vmatpush1.msra.mxu0 0.0
    %1362 = vmatprep.subr.mxu0 0.0
    %1363 = vmatpush1.msra.mxu0 0.0
    %1364 = vmatprep.mubr.f32.mxu0 0.0
    %v1365 = vand.u32 %v406, 4294901760
    %v1366 = vsub.f32 %v406, %v1365
    %v1367 = vand.u32 %v1366, 4294901760
    %1368 = vmatmul.mubr.f32.gmra.mrb[0].mxu0 %v1367
    %v1369 = vpop.f32.mrb[0].mxu0
    %v1370 = vadd.f32 %v1286, %v1369
    %v1371 = vpop.f32.mrb[0].mxu0
    %v1372 = vadd.f32 %v1288, %v1371
    %1373 = vdwg.mxu0
    %v1374 = vand.u32 %v385, 4294901760
    %v1375 = vsub.f32 %v385, %v1374
    %v1376 = vand.u32 %v1375, 4294901760
    %1377 = vmatprep.subr.mxu0 %v1376
    %v1378 = vand.u32 %v384, 4294901760
    %v1379 = vsub.f32 %v384, %v1378
    %v1380 = vand.u32 %v1379, 4294901760
    %1381 = vmatpush1.msra.mxu0 %v1380
    %v1382 = vand.u32 %v389, 4294901760
    %v1383 = vsub.f32 %v389, %v1382
    %v1384 = vand.u32 %v1383, 4294901760
    %1385 = vmatprep.subr.mxu0 %v1384
    %v1386 = vand.u32 %v388, 4294901760
    %v1387 = vsub.f32 %v388, %v1386
    %v1388 = vand.u32 %v1387, 4294901760
    %1389 = vmatpush1.msra.mxu0 %v1388
    %v1390 = vand.u32 %v393, 4294901760
    %v1391 = vsub.f32 %v393, %v1390
    %v1392 = vand.u32 %v1391, 4294901760
    %1393 = vmatprep.subr.mxu0 %v1392
    %v1394 = vand.u32 %v392, 4294901760
    %v1395 = vsub.f32 %v392, %v1394
    %v1396 = vand.u32 %v1395, 4294901760
    %1397 = vmatpush1.msra.mxu0 %v1396
    %v1398 = vand.u32 %v397, 4294901760
    %v1399 = vsub.f32 %v397, %v1398
    %v1400 = vand.u32 %v1399, 4294901760
    %1401 = vmatprep.subr.mxu0 %v1400
    %v1402 = vand.u32 %v396, 4294901760
    %v1403 = vsub.f32 %v396, %v1402
    %v1404 = vand.u32 %v1403, 4294901760
    %1405 = vmatpush1.msra.mxu0 %v1404
    %v1406 = vand.u32 %v418, 4294901760
    %v1407 = vsub.f32 %v418, %v1406
    %v1408 = vand.u32 %v1407, 4294901760
    %1409 = vmatprep.subr.mxu0 %v1408
    %v1410 = vand.u32 %v415, 4294901760
    %v1411 = vsub.f32 %v415, %v1410
    %v1412 = vand.u32 %v1411, 4294901760
    %1413 = vmatpush1.msra.mxu0 %v1412
    %1414 = vmatprep.subr.mxu0 0.0
    %1415 = vmatpush1.msra.mxu0 0.0
    %1416 = vmatprep.subr.mxu0 0.0
    %1417 = vmatpush1.msra.mxu0 0.0
    %1418 = vmatprep.subr.mxu0 0.0
    %1419 = vmatpush1.msra.mxu0 0.0
    %1420 = vmatprep.subr.mxu0 0.0
    %1421 = vmatpush1.msra.mxu0 0.0
    %1422 = vmatprep.subr.mxu0 0.0
    %1423 = vmatpush1.msra.mxu0 0.0
    %1424 = vmatprep.subr.mxu0 0.0
    %1425 = vmatpush1.msra.mxu0 0.0
    %1426 = vmatprep.subr.mxu0 0.0
    %1427 = vmatpush1.msra.mxu0 0.0
    %1428 = vmatprep.subr.mxu0 0.0
    %1429 = vmatpush1.msra.mxu0 0.0
    %1430 = vmatprep.subr.mxu0 0.0
    %1431 = vmatpush1.msra.mxu0 0.0
    %1432 = vmatprep.subr.mxu0 0.0
    %1433 = vmatpush1.msra.mxu0 0.0
    %1434 = vmatprep.subr.mxu0 0.0
    %1435 = vmatpush1.msra.mxu0 0.0
    %1436 = vmatprep.subr.mxu0 0.0
    %1437 = vmatpush1.msra.mxu0 0.0
    %1438 = vmatprep.subr.mxu0 0.0
    %1439 = vmatpush1.msra.mxu0 0.0
    %1440 = vmatprep.subr.mxu0 0.0
    %1441 = vmatpush1.msra.mxu0 0.0
    %1442 = vmatprep.subr.mxu0 0.0
    %1443 = vmatpush1.msra.mxu0 0.0
    %1444 = vmatprep.subr.mxu0 0.0
    %1445 = vmatpush1.msra.mxu0 0.0
    %1446 = vmatprep.subr.mxu0 0.0
    %1447 = vmatpush1.msra.mxu0 0.0
    %1448 = vmatprep.subr.mxu0 0.0
    %1449 = vmatpush1.msra.mxu0 0.0
    %1450 = vmatprep.subr.mxu0 0.0
    %1451 = vmatpush1.msra.mxu0 0.0
    %1452 = vmatprep.subr.mxu0 0.0
    %1453 = vmatpush1.msra.mxu0 0.0
    %1454 = vmatprep.subr.mxu0 0.0
    %1455 = vmatpush1.msra.mxu0 0.0
    %1456 = vmatprep.subr.mxu0 0.0
    %1457 = vmatpush1.msra.mxu0 0.0
    %1458 = vmatprep.subr.mxu0 0.0
    %1459 = vmatpush1.msra.mxu0 0.0
    %1460 = vmatprep.subr.mxu0 0.0
    %1461 = vmatpush1.msra.mxu0 0.0
    %1462 = vmatprep.subr.mxu0 0.0
    %1463 = vmatpush1.msra.mxu0 0.0
    %1464 = vmatprep.subr.mxu0 0.0
    %1465 = vmatpush1.msra.mxu0 0.0
    %1466 = vmatprep.subr.mxu0 0.0
    %1467 = vmatpush1.msra.mxu0 0.0
    %1468 = vmatprep.mubr.f32.mxu0 0.0
    %v1469 = vand.u32 %v406, 4294901760
    %1470 = vmatmul.mubr.f32.gmra.mrb[0].mxu0 %v1469
    %v1471 = vpop.f32.mrb[0].mxu0
    %v1472 = vadd.f32 %v1370, %v1471
    %v1473 = vpop.f32.mrb[0].mxu0
    %v1474 = vadd.f32 %v1372, %v1473
    %1475 = vdwg.mxu0
    %v1476 = vand.u32 %v385, 4294901760
    %1477 = vmatprep.subr.mxu0 %v1476
    %v1478 = vand.u32 %v384, 4294901760
    %1479 = vmatpush1.msra.mxu0 %v1478
    %v1480 = vand.u32 %v389, 4294901760
    %1481 = vmatprep.subr.mxu0 %v1480
    %v1482 = vand.u32 %v388, 4294901760
    %1483 = vmatpush1.msra.mxu0 %v1482
    %v1484 = vand.u32 %v393, 4294901760
    %1485 = vmatprep.subr.mxu0 %v1484
    %v1486 = vand.u32 %v392, 4294901760
    %1487 = vmatpush1.msra.mxu0 %v1486
    %v1488 = vand.u32 %v397, 4294901760
    %1489 = vmatprep.subr.mxu0 %v1488
    %v1490 = vand.u32 %v396, 4294901760
    %1491 = vmatpush1.msra.mxu0 %v1490
    %v1492 = vand.u32 %v418, 4294901760
    %1493 = vmatprep.subr.mxu0 %v1492
    %v1494 = vand.u32 %v415, 4294901760
    %1495 = vmatpush1.msra.mxu0 %v1494
    %1496 = vmatprep.subr.mxu0 0.0
    %1497 = vmatpush1.msra.mxu0 0.0
    %1498 = vmatprep.subr.mxu0 0.0
    %1499 = vmatpush1.msra.mxu0 0.0
    %1500 = vmatprep.subr.mxu0 0.0
    %1501 = vmatpush1.msra.mxu0 0.0
    %1502 = vmatprep.subr.mxu0 0.0
    %1503 = vmatpush1.msra.mxu0 0.0
    %1504 = vmatprep.subr.mxu0 0.0
    %1505 = vmatpush1.msra.mxu0 0.0
    %1506 = vmatprep.subr.mxu0 0.0
    %1507 = vmatpush1.msra.mxu0 0.0
    %1508 = vmatprep.subr.mxu0 0.0
    %1509 = vmatpush1.msra.mxu0 0.0
    %1510 = vmatprep.subr.mxu0 0.0
    %1511 = vmatpush1.msra.mxu0 0.0
    %1512 = vmatprep.subr.mxu0 0.0
    %1513 = vmatpush1.msra.mxu0 0.0
    %1514 = vmatprep.subr.mxu0 0.0
    %1515 = vmatpush1.msra.mxu0 0.0
    %1516 = vmatprep.subr.mxu0 0.0
    %1517 = vmatpush1.msra.mxu0 0.0
    %1518 = vmatprep.subr.mxu0 0.0
    %1519 = vmatpush1.msra.mxu0 0.0
    %1520 = vmatprep.subr.mxu0 0.0
    %1521 = vmatpush1.msra.mxu0 0.0
    %1522 = vmatprep.subr.mxu0 0.0
    %1523 = vmatpush1.msra.mxu0 0.0
    %1524 = vmatprep.subr.mxu0 0.0
    %1525 = vmatpush1.msra.mxu0 0.0
    %1526 = vmatprep.subr.mxu0 0.0
    %1527 = vmatpush1.msra.mxu0 0.0
    %1528 = vmatprep.subr.mxu0 0.0
    %1529 = vmatpush1.msra.mxu0 0.0
    %1530 = vmatprep.subr.mxu0 0.0
    %1531 = vmatpush1.msra.mxu0 0.0
    %1532 = vmatprep.subr.mxu0 0.0
    %1533 = vmatpush1.msra.mxu0 0.0
    %1534 = vmatprep.subr.mxu0 0.0
    %1535 = vmatpush1.msra.mxu0 0.0
    %1536 = vmatprep.subr.mxu0 0.0
    %1537 = vmatpush1.msra.mxu0 0.0
    %1538 = vmatprep.subr.mxu0 0.0
    %1539 = vmatpush1.msra.mxu0 0.0
    %1540 = vmatprep.subr.mxu0 0.0
    %1541 = vmatpush1.msra.mxu0 0.0
    %1542 = vmatprep.subr.mxu0 0.0
    %1543 = vmatpush1.msra.mxu0 0.0
    %1544 = vmatprep.subr.mxu0 0.0
    %1545 = vmatpush1.msra.mxu0 0.0
    %1546 = vmatprep.subr.mxu0 0.0
    %1547 = vmatpush1.msra.mxu0 0.0
    %1548 = vmatprep.subr.mxu0 0.0
    %1549 = vmatpush1.msra.mxu0 0.0
    %1550 = vmatprep.mubr.f32.mxu0 0.0
    %v1551 = vand.u32 %v406, 4294901760
    %1552 = vmatmul.mubr.f32.gmra.mrb[0].mxu0 %v1551
    %v1553 = vpop.f32.mrb[0].mxu0
    %v1554 = vadd.f32 %v1472, %v1553
    %v1555 = vpop.f32.mrb[0].mxu0
    %v1556 = vadd.f32 %v1474, %v1555
    %1557 = vdwg.mxu0
    %vm1558 = vcmp.gt.f32.partialorder %v985, 0.0
    %vm1559 = vcmp.gt.f32.partialorder %v987, 0.0
    %vm1560 = vcmp.gt.f32.partialorder %v1554, 0.0
    %vm1561 = vcmp.gt.f32.partialorder %v1556, 0.0
    %v1562 = vmul.f32 %v985, 0.2
    %v1563 = vmul.f32 %v987, 0.2
    %v1564 = vmul.f32 %v1554, 0.2
    %v1565 = vmul.f32 %v1556, 0.2
    %v1566 = vsel %vm1558, %v985, %v1562
    %v1567 = vsel %vm1559, %v987, %v1563
    %v1568 = vsel %vm1560, %v1554, %v1564
    %v1569 = vsel %vm1561, %v1556, %v1565
    %v1570 = vld [vmem:[%s4] sm:$0xf]
    %1571 = vrot.lane.b32.xlu0 %v1566, 17
    %v1572 = vpop.permute.xlu0 %1571
    %1573 = vrot.lane.b32.xlu0 %v1567, 17
    %v1574 = vpop.permute.xlu0 %1573
    %1575 = vrot.lane.b32.xlu0 %v1568, 17
    %v1576 = vpop.permute.xlu0 %1575
    %1577 = vrot.lane.b32.xlu0 %v1569, 17
    %v1578 = vpop.permute.xlu0 %1577
    %v1579 = vsel %vm77, %v1576, %v1578
    %v1580 = vsel %vm77, %v1574, %v1576
    %v1581 = vsel %vm77, %v1572, %v1574
    %v1582 = vsel %vm77, %v1578, %v1572
    %v1583 = vmul.f32 %v1582, %v85
    %v1584 = vmul.f32 %v1581, %v89
    %v1585 = vmul.f32 %v1580, %v93
    %v1586 = vmul.f32 %v1579, %v97
    %1587 = vrot.lane.b32.xlu0 %v1566, 16
    %v1588 = vpop.permute.xlu0 %1587
    %1589 = vrot.lane.b32.xlu0 %v1567, 16
    %v1590 = vpop.permute.xlu0 %1589
    %1591 = vrot.lane.b32.xlu0 %v1568, 16
    %v1592 = vpop.permute.xlu0 %1591
    %1593 = vrot.lane.b32.xlu0 %v1569, 16
    %v1594 = vpop.permute.xlu0 %1593
    %v1595 = vsel %vm110, %v1592, %v1594
    %v1596 = vsel %vm110, %v1590, %v1592
    %v1597 = vsel %vm110, %v1588, %v1590
    %v1598 = vsel %vm110, %v1594, %v1588
    %v1599 = vmul.f32 %v1598, %v118
    %v1600 = vmul.f32 %v1597, %v122
    %v1601 = vmul.f32 %v1596, %v126
    %v1602 = vmul.f32 %v1595, %v130
    %1603 = vrot.lane.b32.xlu0 %v1566, 15
    %v1604 = vpop.permute.xlu0 %1603
    %1605 = vrot.lane.b32.xlu0 %v1567, 15
    %v1606 = vpop.permute.xlu0 %1605
    %1607 = vrot.lane.b32.xlu0 %v1568, 15
    %v1608 = vpop.permute.xlu0 %1607
    %1609 = vrot.lane.b32.xlu0 %v1569, 15
    %v1610 = vpop.permute.xlu0 %1609
    %v1611 = vsel %vm143, %v1608, %v1610
    %v1612 = vsel %vm143, %v1606, %v1608
    %v1613 = vsel %vm143, %v1604, %v1606
    %v1614 = vsel %vm143, %v1610, %v1604
    %v1615 = vmul.f32 %v1614, %v151
    %v1616 = vmul.f32 %v1613, %v155
    %v1617 = vmul.f32 %v1612, %v159
    %v1618 = vmul.f32 %v1611, %v163
    %1619 = vrot.lane.b32.xlu0 %v1566, 1
    %v1620 = vpop.permute.xlu0 %1619
    %1621 = vrot.lane.b32.xlu0 %v1567, 1
    %v1622 = vpop.permute.xlu0 %1621
    %1623 = vrot.lane.b32.xlu0 %v1568, 1
    %v1624 = vpop.permute.xlu0 %1623
    %1625 = vrot.lane.b32.xlu0 %v1569, 1
    %v1626 = vpop.permute.xlu0 %1625
    %v1627 = vsel %vm176, %v1624, %v1626
    %v1628 = vsel %vm176, %v1622, %v1624
    %v1629 = vsel %vm176, %v1620, %v1622
    %v1630 = vsel %vm176, %v1626, %v1620
    %v1631 = vmul.f32 %v1630, %v184
    %v1632 = vmul.f32 %v1629, %v188
    %v1633 = vmul.f32 %v1628, %v192
    %v1634 = vmul.f32 %v1627, %v196
    %1635 = vrot.lane.b32.xlu0 %v1566, 127
    %v1636 = vpop.permute.xlu0 %1635
    %1637 = vrot.lane.b32.xlu0 %v1567, 127
    %v1638 = vpop.permute.xlu0 %1637
    %1639 = vrot.lane.b32.xlu0 %v1568, 127
    %v1640 = vpop.permute.xlu0 %1639
    %1641 = vrot.lane.b32.xlu0 %v1569, 127
    %v1642 = vpop.permute.xlu0 %1641
    %v1643 = vsel %vm209, %v1640, %v1642
    %v1644 = vsel %vm209, %v1638, %v1640
    %v1645 = vsel %vm209, %v1636, %v1638
    %v1646 = vsel %vm209, %v1642, %v1636
    %v1647 = vmul.f32 %v1645, %v217
    %v1648 = vmul.f32 %v1644, %v221
    %v1649 = vmul.f32 %v1643, %v225
    %v1650 = vmul.f32 %v1646, %v229
    %1651 = vrot.lane.b32.xlu0 %v1566, 113
    %v1652 = vpop.permute.xlu0 %1651
    %1653 = vrot.lane.b32.xlu0 %v1567, 113
    %v1654 = vpop.permute.xlu0 %1653
    %1655 = vrot.lane.b32.xlu0 %v1568, 113
    %v1656 = vpop.permute.xlu0 %1655
    %1657 = vrot.lane.b32.xlu0 %v1569, 113
    %v1658 = vpop.permute.xlu0 %1657
    %v1659 = vsel %vm242, %v1656, %v1658
    %v1660 = vsel %vm242, %v1654, %v1656
    %v1661 = vsel %vm242, %v1652, %v1654
    %v1662 = vsel %vm242, %v1658, %v1652
    %v1663 = vmul.f32 %v1661, %v250
    %v1664 = vmul.f32 %v1660, %v254
    %v1665 = vmul.f32 %v1659, %v258
    %v1666 = vmul.f32 %v1662, %v262
    %1667 = vrot.lane.b32.xlu0 %v1566, 112
    %v1668 = vpop.permute.xlu0 %1667
    %1669 = vrot.lane.b32.xlu0 %v1567, 112
    %v1670 = vpop.permute.xlu0 %1669
    %1671 = vrot.lane.b32.xlu0 %v1568, 112
    %v1672 = vpop.permute.xlu0 %1671
    %1673 = vrot.lane.b32.xlu0 %v1569, 112
    %v1674 = vpop.permute.xlu0 %1673
    %v1675 = vsel %vm275, %v1672, %v1674
    %v1676 = vsel %vm275, %v1670, %v1672
    %v1677 = vsel %vm275, %v1668, %v1670
    %v1678 = vsel %vm275, %v1674, %v1668
    %v1679 = vmul.f32 %v1677, %v283
    %v1680 = vmul.f32 %v1676, %v287
    %v1681 = vmul.f32 %v1675, %v291
    %v1682 = vmul.f32 %v1678, %v295
    %1683 = vrot.lane.b32.xlu0 %v1566, 111
    %v1684 = vpop.permute.xlu0 %1683
    %1685 = vrot.lane.b32.xlu0 %v1567, 111
    %v1686 = vpop.permute.xlu0 %1685
    %1687 = vrot.lane.b32.xlu0 %v1568, 111
    %v1688 = vpop.permute.xlu0 %1687
    %1689 = vrot.lane.b32.xlu0 %v1569, 111
    %v1690 = vpop.permute.xlu0 %1689
    %v1691 = vsel %vm308, %v1688, %v1690
    %v1692 = vsel %vm308, %v1686, %v1688
    %v1693 = vsel %vm308, %v1684, %v1686
    %v1694 = vsel %vm308, %v1690, %v1684
    %v1695 = vmul.f32 %v1693, %v316
    %v1696 = vmul.f32 %v1692, %v320
    %v1697 = vmul.f32 %v1691, %v324
    %v1698 = vmul.f32 %v1694, %v328
    %v1703 = vrot.slane %v1599, 4
    %v1704 = vrot.slane %v1600, 4
    %v1705 = vrot.slane %v1601, 4
    %v1706 = vrot.slane %v1602, 4
    %v1715 = vrot.slane %v1631, 4
    %v1716 = vrot.slane %v1632, 4
    %v1717 = vrot.slane %v1633, 4
    %v1718 = vrot.slane %v1634, 4
    %v1727 = vrot.slane %v1647, 4
    %v1728 = vrot.slane %v1648, 4
    %v1729 = vrot.slane %v1649, 4
    %v1730 = vrot.slane %v1650, 4
    %v1739 = vrot.slane %v1679, 4
    %v1740 = vrot.slane %v1680, 4
    %v1741 = vrot.slane %v1681, 4
    %v1742 = vrot.slane %v1682, 4
    %v1747 = vsel %vm381, %v1583, %v1703
    %v1748 = vsel %vm381, %v1584, %v1704
    %v1749 = vsel %vm381, %v1585, %v1705
    %v1750 = vsel %vm381, %v1586, %v1706
    %v1751 = vsel %vm381, %v1615, %v1715
    %v1752 = vsel %vm381, %v1616, %v1716
    %v1753 = vsel %vm381, %v1617, %v1717
    %v1754 = vsel %vm381, %v1618, %v1718
    %v1755 = vsel %vm381, %v1566, %v1727
    %v1756 = vsel %vm381, %v1567, %v1728
    %v1757 = vsel %vm381, %v1568, %v1729
    %v1758 = vsel %vm381, %v1569, %v1730
    %v1759 = vsel %vm381, %v1663, %v1739
    %v1760 = vsel %vm381, %v1664, %v1740
    %v1761 = vsel %vm381, %v1665, %v1741
    %v1762 = vsel %vm381, %v1666, %v1742
    %v1763 = vld [vmem:[%s5] sm:$0xf]
    %1765 = vset.pattern.permute.xlu0 0
    %1766 = vperm.xlu0 %1765, %v1763
    %v1767 = vpop.permute.xlu0 %1766
    %v1770 = vsel %vm404, %v1570, 0
    %v1773 = vsel %vm381, %v1695, 0
    %v1776 = vsel %vm381, %v1696, 0
    %v1779 = vsel %vm381, %v1697, 0
    %v1782 = vsel %vm381, %v1698, 0
    %v1784 = vand.u32 %v1748, 4294901760
    %1785 = vmatprep.subr.mxu0 %v1784
    %v1786 = vand.u32 %v1747, 4294901760
    %1787 = vmatpush1.msra.mxu0 %v1786
    %v1788 = vand.u32 %v1752, 4294901760
    %1789 = vmatprep.subr.mxu0 %v1788
    %v1790 = vand.u32 %v1751, 4294901760
    %1791 = vmatpush1.msra.mxu0 %v1790
    %v1792 = vand.u32 %v1756, 4294901760
    %1793 = vmatprep.subr.mxu0 %v1792
    %v1794 = vand.u32 %v1755, 4294901760
    %1795 = vmatpush1.msra.mxu0 %v1794
    %v1796 = vand.u32 %v1760, 4294901760
    %1797 = vmatprep.subr.mxu0 %v1796
    %v1798 = vand.u32 %v1759, 4294901760
    %1799 = vmatpush1.msra.mxu0 %v1798
    %v1800 = vand.u32 %v1776, 4294901760
    %1801 = vmatprep.subr.mxu0 %v1800
    %v1802 = vand.u32 %v1773, 4294901760
    %1803 = vmatpush1.msra.mxu0 %v1802
    %1804 = vmatprep.subr.mxu0 0.0
    %1805 = vmatpush1.msra.mxu0 0.0
    %1806 = vmatprep.subr.mxu0 0.0
    %1807 = vmatpush1.msra.mxu0 0.0
    %1808 = vmatprep.subr.mxu0 0.0
    %1809 = vmatpush1.msra.mxu0 0.0
    %1810 = vmatprep.subr.mxu0 0.0
    %1811 = vmatpush1.msra.mxu0 0.0
    %1812 = vmatprep.subr.mxu0 0.0
    %1813 = vmatpush1.msra.mxu0 0.0
    %1814 = vmatprep.subr.mxu0 0.0
    %1815 = vmatpush1.msra.mxu0 0.0
    %1816 = vmatprep.subr.mxu0 0.0
    %1817 = vmatpush1.msra.mxu0 0.0
    %1818 = vmatprep.subr.mxu0 0.0
    %1819 = vmatpush1.msra.mxu0 0.0
    %1820 = vmatprep.subr.mxu0 0.0
    %1821 = vmatpush1.msra.mxu0 0.0
    %1822 = vmatprep.subr.mxu0 0.0
    %1823 = vmatpush1.msra.mxu0 0.0
    %1824 = vmatprep.subr.mxu0 0.0
    %1825 = vmatpush1.msra.mxu0 0.0
    %1826 = vmatprep.subr.mxu0 0.0
    %1827 = vmatpush1.msra.mxu0 0.0
    %1828 = vmatprep.subr.mxu0 0.0
    %1829 = vmatpush1.msra.mxu0 0.0
    %1830 = vmatprep.subr.mxu0 0.0
    %1831 = vmatpush1.msra.mxu0 0.0
    %1832 = vmatprep.subr.mxu0 0.0
    %1833 = vmatpush1.msra.mxu0 0.0
    %1834 = vmatprep.subr.mxu0 0.0
    %1835 = vmatpush1.msra.mxu0 0.0
    %1836 = vmatprep.subr.mxu0 0.0
    %1837 = vmatpush1.msra.mxu0 0.0
    %1838 = vmatprep.subr.mxu0 0.0
    %1839 = vmatpush1.msra.mxu0 0.0
    %1840 = vmatprep.subr.mxu0 0.0
    %1841 = vmatpush1.msra.mxu0 0.0
    %1842 = vmatprep.subr.mxu0 0.0
    %1843 = vmatpush1.msra.mxu0 0.0
    %1844 = vmatprep.subr.mxu0 0.0
    %1845 = vmatpush1.msra.mxu0 0.0
    %1846 = vmatprep.subr.mxu0 0.0
    %1847 = vmatpush1.msra.mxu0 0.0
    %1848 = vmatprep.subr.mxu0 0.0
    %1849 = vmatpush1.msra.mxu0 0.0
    %1850 = vmatprep.subr.mxu0 0.0
    %1851 = vmatpush1.msra.mxu0 0.0
    %1852 = vmatprep.subr.mxu0 0.0
    %1853 = vmatpush1.msra.mxu0 0.0
    %1854 = vmatprep.subr.mxu0 0.0
    %1855 = vmatpush1.msra.mxu0 0.0
    %1856 = vmatprep.subr.mxu0 0.0
    %1857 = vmatpush1.msra.mxu0 0.0
    %1858 = vmatprep.mubr.f32.mxu0 0.0
    %v1859 = vand.u32 %v1770, 4294901760
    %v1860 = vsub.f32 %v1770, %v1859
    %v1861 = vand.u32 %v1860, 4294901760
    %v1862 = vsub.f32 %v1860, %v1861
    %v1863 = vand.u32 %v1862, 4294901760
    %1864 = vmatmul.mubr.f32.gmra.mrb[0].mxu0 %v1863
    %v1865 = vpop.f32.mrb[0].mxu0
    %v1866 = vadd.f32 %v1767, %v1865
    %v1867 = vpop.f32.mrb[0].mxu0
    %v1868 = vadd.f32 %v1767, %v1867
    %1869 = vdwg.mxu0
    %v1870 = vand.u32 %v1748, 4294901760
    %v1871 = vsub.f32 %v1748, %v1870
    %v1872 = vand.u32 %v1871, 4294901760
    %v1873 = vsub.f32 %v1871, %v1872
    %v1874 = vand.u32 %v1873, 4294901760
    %1875 = vmatprep.subr.mxu0 %v1874
    %v1876 = vand.u32 %v1747, 4294901760
    %v1877 = vsub.f32 %v1747, %v1876
    %v1878 = vand.u32 %v1877, 4294901760
    %v1879 = vsub.f32 %v1877, %v1878
    %v1880 = vand.u32 %v1879, 4294901760
    %1881 = vmatpush1.msra.mxu0 %v1880
    %v1882 = vand.u32 %v1752, 4294901760
    %v1883 = vsub.f32 %v1752, %v1882
    %v1884 = vand.u32 %v1883, 4294901760
    %v1885 = vsub.f32 %v1883, %v1884
    %v1886 = vand.u32 %v1885, 4294901760
    %1887 = vmatprep.subr.mxu0 %v1886
    %v1888 = vand.u32 %v1751, 4294901760
    %v1889 = vsub.f32 %v1751, %v1888
    %v1890 = vand.u32 %v1889, 4294901760
    %v1891 = vsub.f32 %v1889, %v1890
    %v1892 = vand.u32 %v1891, 4294901760
    %1893 = vmatpush1.msra.mxu0 %v1892
    %v1894 = vand.u32 %v1756, 4294901760
    %v1895 = vsub.f32 %v1756, %v1894
    %v1896 = vand.u32 %v1895, 4294901760
    %v1897 = vsub.f32 %v1895, %v1896
    %v1898 = vand.u32 %v1897, 4294901760
    %1899 = vmatprep.subr.mxu0 %v1898
    %v1900 = vand.u32 %v1755, 4294901760
    %v1901 = vsub.f32 %v1755, %v1900
    %v1902 = vand.u32 %v1901, 4294901760
    %v1903 = vsub.f32 %v1901, %v1902
    %v1904 = vand.u32 %v1903, 4294901760
    %1905 = vmatpush1.msra.mxu0 %v1904
    %v1906 = vand.u32 %v1760, 4294901760
    %v1907 = vsub.f32 %v1760, %v1906
    %v1908 = vand.u32 %v1907, 4294901760
    %v1909 = vsub.f32 %v1907, %v1908
    %v1910 = vand.u32 %v1909, 4294901760
    %1911 = vmatprep.subr.mxu0 %v1910
    %v1912 = vand.u32 %v1759, 4294901760
    %v1913 = vsub.f32 %v1759, %v1912
    %v1914 = vand.u32 %v1913, 4294901760
    %v1915 = vsub.f32 %v1913, %v1914
    %v1916 = vand.u32 %v1915, 4294901760
    %1917 = vmatpush1.msra.mxu0 %v1916
    %v1918 = vand.u32 %v1776, 4294901760
    %v1919 = vsub.f32 %v1776, %v1918
    %v1920 = vand.u32 %v1919, 4294901760
    %v1921 = vsub.f32 %v1919, %v1920
    %v1922 = vand.u32 %v1921, 4294901760
    %1923 = vmatprep.subr.mxu0 %v1922
    %v1924 = vand.u32 %v1773, 4294901760
    %v1925 = vsub.f32 %v1773, %v1924
    %v1926 = vand.u32 %v1925, 4294901760
    %v1927 = vsub.f32 %v1925, %v1926
    %v1928 = vand.u32 %v1927, 4294901760
    %1929 = vmatpush1.msra.mxu0 %v1928
    %1930 = vmatprep.subr.mxu0 0.0
    %1931 = vmatpush1.msra.mxu0 0.0
    %1932 = vmatprep.subr.mxu0 0.0
    %1933 = vmatpush1.msra.mxu0 0.0
    %1934 = vmatprep.subr.mxu0 0.0
    %1935 = vmatpush1.msra.mxu0 0.0
    %1936 = vmatprep.subr.mxu0 0.0
    %1937 = vmatpush1.msra.mxu0 0.0
    %1938 = vmatprep.subr.mxu0 0.0
    %1939 = vmatpush1.msra.mxu0 0.0
    %1940 = vmatprep.subr.mxu0 0.0
    %1941 = vmatpush1.msra.mxu0 0.0
    %1942 = vmatprep.subr.mxu0 0.0
    %1943 = vmatpush1.msra.mxu0 0.0
    %1944 = vmatprep.subr.mxu0 0.0
    %1945 = vmatpush1.msra.mxu0 0.0
    %1946 = vmatprep.subr.mxu0 0.0
    %1947 = vmatpush1.msra.mxu0 0.0
    %1948 = vmatprep.subr.mxu0 0.0
    %1949 = vmatpush1.msra.mxu0 0.0
    %1950 = vmatprep.subr.mxu0 0.0
    %1951 = vmatpush1.msra.mxu0 0.0
    %1952 = vmatprep.subr.mxu0 0.0
    %1953 = vmatpush1.msra.mxu0 0.0
    %1954 = vmatprep.subr.mxu0 0.0
    %1955 = vmatpush1.msra.mxu0 0.0
    %1956 = vmatprep.subr.mxu0 0.0
    %1957 = vmatpush1.msra.mxu0 0.0
    %1958 = vmatprep.subr.mxu0 0.0
    %1959 = vmatpush1.msra.mxu0 0.0
    %1960 = vmatprep.subr.mxu0 0.0
    %1961 = vmatpush1.msra.mxu0 0.0
    %1962 = vmatprep.subr.mxu0 0.0
    %1963 = vmatpush1.msra.mxu0 0.0
    %1964 = vmatprep.subr.mxu0 0.0
    %1965 = vmatpush1.msra.mxu0 0.0
    %1966 = vmatprep.subr.mxu0 0.0
    %1967 = vmatpush1.msra.mxu0 0.0
    %1968 = vmatprep.subr.mxu0 0.0
    %1969 = vmatpush1.msra.mxu0 0.0
    %1970 = vmatprep.subr.mxu0 0.0
    %1971 = vmatpush1.msra.mxu0 0.0
    %1972 = vmatprep.subr.mxu0 0.0
    %1973 = vmatpush1.msra.mxu0 0.0
    %1974 = vmatprep.subr.mxu0 0.0
    %1975 = vmatpush1.msra.mxu0 0.0
    %1976 = vmatprep.subr.mxu0 0.0
    %1977 = vmatpush1.msra.mxu0 0.0
    %1978 = vmatprep.subr.mxu0 0.0
    %1979 = vmatpush1.msra.mxu0 0.0
    %1980 = vmatprep.subr.mxu0 0.0
    %1981 = vmatpush1.msra.mxu0 0.0
    %1982 = vmatprep.subr.mxu0 0.0
    %1983 = vmatpush1.msra.mxu0 0.0
    %1984 = vmatprep.mubr.f32.mxu0 0.0
    %v1985 = vand.u32 %v1770, 4294901760
    %1986 = vmatmul.mubr.f32.gmra.mrb[0].mxu0 %v1985
    %v1987 = vpop.f32.mrb[0].mxu0
    %v1988 = vadd.f32 %v1866, %v1987
    %v1989 = vpop.f32.mrb[0].mxu0
    %v1990 = vadd.f32 %v1868, %v1989
    %1991 = vdwg.mxu0
    %v1992 = vand.u32 %v1748, 4294901760
    %v1993 = vsub.f32 %v1748, %v1992
    %1994 = vmatprep.subr.mxu0 %v1993
    %v1995 = vand.u32 %v1747, 4294901760
    %v1996 = vsub.f32 %v1747, %v1995
    %1997 = vmatpush1.msra.mxu0 %v1996
    %v1998 = vand.u32 %v1752, 4294901760
    %v1999 = vsub.f32 %v1752, %v1998
    %2000 = vmatprep.subr.mxu0 %v1999
    %v2001 = vand.u32 %v1751, 4294901760
    %v2002 = vsub.f32 %v1751, %v2001
    %2003 = vmatpush1.msra.mxu0 %v2002
    %v2004 = vand.u32 %v1756, 4294901760
    %v2005 = vsub.f32 %v1756, %v2004
    %2006 = vmatprep.subr.mxu0 %v2005
    %v2007 = vand.u32 %v1755, 4294901760
    %v2008 = vsub.f32 %v1755, %v2007
    %2009 = vmatpush1.msra.mxu0 %v2008
    %v2010 = vand.u32 %v1760, 4294901760
    %v2011 = vsub.f32 %v1760, %v2010
    %2012 = vmatprep.subr.mxu0 %v2011
    %v2013 = vand.u32 %v1759, 4294901760
    %v2014 = vsub.f32 %v1759, %v2013
    %2015 = vmatpush1.msra.mxu0 %v2014
    %v2016 = vand.u32 %v1776, 4294901760
    %v2017 = vsub.f32 %v1776, %v2016
    %2018 = vmatprep.subr.mxu0 %v2017
    %v2019 = vand.u32 %v1773, 4294901760
    %v2020 = vsub.f32 %v1773, %v2019
    %2021 = vmatpush1.msra.mxu0 %v2020
    %2022 = vmatprep.subr.mxu0 0.0
    %2023 = vmatpush1.msra.mxu0 0.0
    %2024 = vmatprep.subr.mxu0 0.0
    %2025 = vmatpush1.msra.mxu0 0.0
    %2026 = vmatprep.subr.mxu0 0.0
    %2027 = vmatpush1.msra.mxu0 0.0
    %2028 = vmatprep.subr.mxu0 0.0
    %2029 = vmatpush1.msra.mxu0 0.0
    %2030 = vmatprep.subr.mxu0 0.0
    %2031 = vmatpush1.msra.mxu0 0.0
    %2032 = vmatprep.subr.mxu0 0.0
    %2033 = vmatpush1.msra.mxu0 0.0
    %2034 = vmatprep.subr.mxu0 0.0
    %2035 = vmatpush1.msra.mxu0 0.0
    %2036 = vmatprep.subr.mxu0 0.0
    %2037 = vmatpush1.msra.mxu0 0.0
    %2038 = vmatprep.subr.mxu0 0.0
    %2039 = vmatpush1.msra.mxu0 0.0
    %2040 = vmatprep.subr.mxu0 0.0
    %2041 = vmatpush1.msra.mxu0 0.0
    %2042 = vmatprep.subr.mxu0 0.0
    %2043 = vmatpush1.msra.mxu0 0.0
    %2044 = vmatprep.subr.mxu0 0.0
    %2045 = vmatpush1.msra.mxu0 0.0
    %2046 = vmatprep.subr.mxu0 0.0
    %2047 = vmatpush1.msra.mxu0 0.0
    %2048 = vmatprep.subr.mxu0 0.0
    %2049 = vmatpush1.msra.mxu0 0.0
    %2050 = vmatprep.subr.mxu0 0.0
    %2051 = vmatpush1.msra.mxu0 0.0
    %2052 = vmatprep.subr.mxu0 0.0
    %2053 = vmatpush1.msra.mxu0 0.0
    %2054 = vmatprep.subr.mxu0 0.0
    %2055 = vmatpush1.msra.mxu0 0.0
    %2056 = vmatprep.subr.mxu0 0.0
    %2057 = vmatpush1.msra.mxu0 0.0
    %2058 = vmatprep.subr.mxu0 0.0
    %2059 = vmatpush1.msra.mxu0 0.0
    %2060 = vmatprep.subr.mxu0 0.0
    %2061 = vmatpush1.msra.mxu0 0.0
    %2062 = vmatprep.subr.mxu0 0.0
    %2063 = vmatpush1.msra.mxu0 0.0
    %2064 = vmatprep.subr.mxu0 0.0
    %2065 = vmatpush1.msra.mxu0 0.0
    %2066 = vmatprep.subr.mxu0 0.0
    %2067 = vmatpush1.msra.mxu0 0.0
    %2068 = vmatprep.subr.mxu0 0.0
    %2069 = vmatpush1.msra.mxu0 0.0
    %2070 = vmatprep.subr.mxu0 0.0
    %2071 = vmatpush1.msra.mxu0 0.0
    %2072 = vmatprep.subr.mxu0 0.0
    %2073 = vmatpush1.msra.mxu0 0.0
    %2074 = vmatprep.subr.mxu0 0.0
    %2075 = vmatpush1.msra.mxu0 0.0
    %2076 = vmatprep.mubr.f32.mxu0 0.0
    %v2077 = vand.u32 %v1770, 4294901760
    %v2078 = vsub.f32 %v1770, %v2077
    %2079 = vmatmul.mubr.f32.gmra.mrb[0].mxu0 %v2078
    %v2080 = vpop.f32.mrb[0].mxu0
    %v2081 = vadd.f32 %v1988, %v2080
    %v2082 = vpop.f32.mrb[0].mxu0
    %v2083 = vadd.f32 %v1990, %v2082
    %2084 = vdwg.mxu0
    %v2085 = vand.u32 %v1748, 4294901760
    %2086 = vmatprep.subr.mxu0 %v2085
    %v2087 = vand.u32 %v1747, 4294901760
    %2088 = vmatpush1.msra.mxu0 %v2087
    %v2089 = vand.u32 %v1752, 4294901760
    %2090 = vmatprep.subr.mxu0 %v2089
    %v2091 = vand.u32 %v1751, 4294901760
    %2092 = vmatpush1.msra.mxu0 %v2091
    %v2093 = vand.u32 %v1756, 4294901760
    %2094 = vmatprep.subr.mxu0 %v2093
    %v2095 = vand.u32 %v1755, 4294901760
    %2096 = vmatpush1.msra.mxu0 %v2095
    %v2097 = vand.u32 %v1760, 4294901760
    %2098 = vmatprep.subr.mxu0 %v2097
    %v2099 = vand.u32 %v1759, 4294901760
    %2100 = vmatpush1.msra.mxu0 %v2099
    %v2101 = vand.u32 %v1776, 4294901760
    %2102 = vmatprep.subr.mxu0 %v2101
    %v2103 = vand.u32 %v1773, 4294901760
    %2104 = vmatpush1.msra.mxu0 %v2103
    %2105 = vmatprep.subr.mxu0 0.0
    %2106 = vmatpush1.msra.mxu0 0.0
    %2107 = vmatprep.subr.mxu0 0.0
    %2108 = vmatpush1.msra.mxu0 0.0
    %2109 = vmatprep.subr.mxu0 0.0
    %2110 = vmatpush1.msra.mxu0 0.0
    %2111 = vmatprep.subr.mxu0 0.0
    %2112 = vmatpush1.msra.mxu0 0.0
    %2113 = vmatprep.subr.mxu0 0.0
    %2114 = vmatpush1.msra.mxu0 0.0
    %2115 = vmatprep.subr.mxu0 0.0
    %2116 = vmatpush1.msra.mxu0 0.0
    %2117 = vmatprep.subr.mxu0 0.0
    %2118 = vmatpush1.msra.mxu0 0.0
    %2119 = vmatprep.subr.mxu0 0.0
    %2120 = vmatpush1.msra.mxu0 0.0
    %2121 = vmatprep.subr.mxu0 0.0
    %2122 = vmatpush1.msra.mxu0 0.0
    %2123 = vmatprep.subr.mxu0 0.0
    %2124 = vmatpush1.msra.mxu0 0.0
    %2125 = vmatprep.subr.mxu0 0.0
    %2126 = vmatpush1.msra.mxu0 0.0
    %2127 = vmatprep.subr.mxu0 0.0
    %2128 = vmatpush1.msra.mxu0 0.0
    %2129 = vmatprep.subr.mxu0 0.0
    %2130 = vmatpush1.msra.mxu0 0.0
    %2131 = vmatprep.subr.mxu0 0.0
    %2132 = vmatpush1.msra.mxu0 0.0
    %2133 = vmatprep.subr.mxu0 0.0
    %2134 = vmatpush1.msra.mxu0 0.0
    %2135 = vmatprep.subr.mxu0 0.0
    %2136 = vmatpush1.msra.mxu0 0.0
    %2137 = vmatprep.subr.mxu0 0.0
    %2138 = vmatpush1.msra.mxu0 0.0
    %2139 = vmatprep.subr.mxu0 0.0
    %2140 = vmatpush1.msra.mxu0 0.0
    %2141 = vmatprep.subr.mxu0 0.0
    %2142 = vmatpush1.msra.mxu0 0.0
    %2143 = vmatprep.subr.mxu0 0.0
    %2144 = vmatpush1.msra.mxu0 0.0
    %2145 = vmatprep.subr.mxu0 0.0
    %2146 = vmatpush1.msra.mxu0 0.0
    %2147 = vmatprep.subr.mxu0 0.0
    %2148 = vmatpush1.msra.mxu0 0.0
    %2149 = vmatprep.subr.mxu0 0.0
    %2150 = vmatpush1.msra.mxu0 0.0
    %2151 = vmatprep.subr.mxu0 0.0
    %2152 = vmatpush1.msra.mxu0 0.0
    %2153 = vmatprep.subr.mxu0 0.0
    %2154 = vmatpush1.msra.mxu0 0.0
    %2155 = vmatprep.subr.mxu0 0.0
    %2156 = vmatpush1.msra.mxu0 0.0
    %2157 = vmatprep.subr.mxu0 0.0
    %2158 = vmatpush1.msra.mxu0 0.0
    %2159 = vmatprep.mubr.f32.mxu0 0.0
    %v2160 = vand.u32 %v1770, 4294901760
    %v2161 = vsub.f32 %v1770, %v2160
    %v2162 = vand.u32 %v2161, 4294901760
    %2163 = vmatmul.mubr.f32.gmra.mrb[0].mxu0 %v2162
    %v2164 = vpop.f32.mrb[0].mxu0
    %v2165 = vadd.f32 %v2081, %v2164
    %v2166 = vpop.f32.mrb[0].mxu0
    %v2167 = vadd.f32 %v2083, %v2166
    %2168 = vdwg.mxu0
    %v2169 = vand.u32 %v1748, 4294901760
    %v2170 = vsub.f32 %v1748, %v2169
    %v2171 = vand.u32 %v2170, 4294901760
    %2172 = vmatprep.subr.mxu0 %v2171
    %v2173 = vand.u32 %v1747, 4294901760
    %v2174 = vsub.f32 %v1747, %v2173
    %v2175 = vand.u32 %v2174, 4294901760
    %2176 = vmatpush1.msra.mxu0 %v2175
    %v2177 = vand.u32 %v1752, 4294901760
    %v2178 = vsub.f32 %v1752, %v2177
    %v2179 = vand.u32 %v2178, 4294901760
    %2180 = vmatprep.subr.mxu0 %v2179
    %v2181 = vand.u32 %v1751, 4294901760
    %v2182 = vsub.f32 %v1751, %v2181
    %v2183 = vand.u32 %v2182, 4294901760
    %2184 = vmatpush1.msra.mxu0 %v2183
    %v2185 = vand.u32 %v1756, 4294901760
    %v2186 = vsub.f32 %v1756, %v2185
    %v2187 = vand.u32 %v2186, 4294901760
    %2188 = vmatprep.subr.mxu0 %v2187
    %v2189 = vand.u32 %v1755, 4294901760
    %v2190 = vsub.f32 %v1755, %v2189
    %v2191 = vand.u32 %v2190, 4294901760
    %2192 = vmatpush1.msra.mxu0 %v2191
    %v2193 = vand.u32 %v1760, 4294901760
    %v2194 = vsub.f32 %v1760, %v2193
    %v2195 = vand.u32 %v2194, 4294901760
    %2196 = vmatprep.subr.mxu0 %v2195
    %v2197 = vand.u32 %v1759, 4294901760
    %v2198 = vsub.f32 %v1759, %v2197
    %v2199 = vand.u32 %v2198, 4294901760
    %2200 = vmatpush1.msra.mxu0 %v2199
    %v2201 = vand.u32 %v1776, 4294901760
    %v2202 = vsub.f32 %v1776, %v2201
    %v2203 = vand.u32 %v2202, 4294901760
    %2204 = vmatprep.subr.mxu0 %v2203
    %v2205 = vand.u32 %v1773, 4294901760
    %v2206 = vsub.f32 %v1773, %v2205
    %v2207 = vand.u32 %v2206, 4294901760
    %2208 = vmatpush1.msra.mxu0 %v2207
    %2209 = vmatprep.subr.mxu0 0.0
    %2210 = vmatpush1.msra.mxu0 0.0
    %2211 = vmatprep.subr.mxu0 0.0
    %2212 = vmatpush1.msra.mxu0 0.0
    %2213 = vmatprep.subr.mxu0 0.0
    %2214 = vmatpush1.msra.mxu0 0.0
    %2215 = vmatprep.subr.mxu0 0.0
    %2216 = vmatpush1.msra.mxu0 0.0
    %2217 = vmatprep.subr.mxu0 0.0
    %2218 = vmatpush1.msra.mxu0 0.0
    %2219 = vmatprep.subr.mxu0 0.0
    %2220 = vmatpush1.msra.mxu0 0.0
    %2221 = vmatprep.subr.mxu0 0.0
    %2222 = vmatpush1.msra.mxu0 0.0
    %2223 = vmatprep.subr.mxu0 0.0
    %2224 = vmatpush1.msra.mxu0 0.0
    %2225 = vmatprep.subr.mxu0 0.0
    %2226 = vmatpush1.msra.mxu0 0.0
    %2227 = vmatprep.subr.mxu0 0.0
    %2228 = vmatpush1.msra.mxu0 0.0
    %2229 = vmatprep.subr.mxu0 0.0
    %2230 = vmatpush1.msra.mxu0 0.0
    %2231 = vmatprep.subr.mxu0 0.0
    %2232 = vmatpush1.msra.mxu0 0.0
    %2233 = vmatprep.subr.mxu0 0.0
    %2234 = vmatpush1.msra.mxu0 0.0
    %2235 = vmatprep.subr.mxu0 0.0
    %2236 = vmatpush1.msra.mxu0 0.0
    %2237 = vmatprep.subr.mxu0 0.0
    %2238 = vmatpush1.msra.mxu0 0.0
    %2239 = vmatprep.subr.mxu0 0.0
    %2240 = vmatpush1.msra.mxu0 0.0
    %2241 = vmatprep.subr.mxu0 0.0
    %2242 = vmatpush1.msra.mxu0 0.0
    %2243 = vmatprep.subr.mxu0 0.0
    %2244 = vmatpush1.msra.mxu0 0.0
    %2245 = vmatprep.subr.mxu0 0.0
    %2246 = vmatpush1.msra.mxu0 0.0
    %2247 = vmatprep.subr.mxu0 0.0
    %2248 = vmatpush1.msra.mxu0 0.0
    %2249 = vmatprep.subr.mxu0 0.0
    %2250 = vmatpush1.msra.mxu0 0.0
    %2251 = vmatprep.subr.mxu0 0.0
    %2252 = vmatpush1.msra.mxu0 0.0
    %2253 = vmatprep.subr.mxu0 0.0
    %2254 = vmatpush1.msra.mxu0 0.0
    %2255 = vmatprep.subr.mxu0 0.0
    %2256 = vmatpush1.msra.mxu0 0.0
    %2257 = vmatprep.subr.mxu0 0.0
    %2258 = vmatpush1.msra.mxu0 0.0
    %2259 = vmatprep.subr.mxu0 0.0
    %2260 = vmatpush1.msra.mxu0 0.0
    %2261 = vmatprep.subr.mxu0 0.0
    %2262 = vmatpush1.msra.mxu0 0.0
    %2263 = vmatprep.mubr.f32.mxu0 0.0
    %v2264 = vand.u32 %v1770, 4294901760
    %2265 = vmatmul.mubr.f32.gmra.mrb[0].mxu0 %v2264
    %v2266 = vpop.f32.mrb[0].mxu0
    %v2267 = vadd.f32 %v2165, %v2266
    %v2268 = vpop.f32.mrb[0].mxu0
    %v2269 = vadd.f32 %v2167, %v2268
    %2270 = vdwg.mxu0
    %v2271 = vand.u32 %v1748, 4294901760
    %2272 = vmatprep.subr.mxu0 %v2271
    %v2273 = vand.u32 %v1747, 4294901760
    %2274 = vmatpush1.msra.mxu0 %v2273
    %v2275 = vand.u32 %v1752, 4294901760
    %2276 = vmatprep.subr.mxu0 %v2275
    %v2277 = vand.u32 %v1751, 4294901760
    %2278 = vmatpush1.msra.mxu0 %v2277
    %v2279 = vand.u32 %v1756, 4294901760
    %2280 = vmatprep.subr.mxu0 %v2279
    %v2281 = vand.u32 %v1755, 4294901760
    %2282 = vmatpush1.msra.mxu0 %v2281
    %v2283 = vand.u32 %v1760, 4294901760
    %2284 = vmatprep.subr.mxu0 %v2283
    %v2285 = vand.u32 %v1759, 4294901760
    %2286 = vmatpush1.msra.mxu0 %v2285
    %v2287 = vand.u32 %v1776, 4294901760
    %2288 = vmatprep.subr.mxu0 %v2287
    %v2289 = vand.u32 %v1773, 4294901760
    %2290 = vmatpush1.msra.mxu0 %v2289
    %2291 = vmatprep.subr.mxu0 0.0
    %2292 = vmatpush1.msra.mxu0 0.0
    %2293 = vmatprep.subr.mxu0 0.0
    %2294 = vmatpush1.msra.mxu0 0.0
    %2295 = vmatprep.subr.mxu0 0.0
    %2296 = vmatpush1.msra.mxu0 0.0
    %2297 = vmatprep.subr.mxu0 0.0
    %2298 = vmatpush1.msra.mxu0 0.0
    %2299 = vmatprep.subr.mxu0 0.0
    %2300 = vmatpush1.msra.mxu0 0.0
    %2301 = vmatprep.subr.mxu0 0.0
    %2302 = vmatpush1.msra.mxu0 0.0
    %2303 = vmatprep.subr.mxu0 0.0
    %2304 = vmatpush1.msra.mxu0 0.0
    %2305 = vmatprep.subr.mxu0 0.0
    %2306 = vmatpush1.msra.mxu0 0.0
    %2307 = vmatprep.subr.mxu0 0.0
    %2308 = vmatpush1.msra.mxu0 0.0
    %2309 = vmatprep.subr.mxu0 0.0
    %2310 = vmatpush1.msra.mxu0 0.0
    %2311 = vmatprep.subr.mxu0 0.0
    %2312 = vmatpush1.msra.mxu0 0.0
    %2313 = vmatprep.subr.mxu0 0.0
    %2314 = vmatpush1.msra.mxu0 0.0
    %2315 = vmatprep.subr.mxu0 0.0
    %2316 = vmatpush1.msra.mxu0 0.0
    %2317 = vmatprep.subr.mxu0 0.0
    %2318 = vmatpush1.msra.mxu0 0.0
    %2319 = vmatprep.subr.mxu0 0.0
    %2320 = vmatpush1.msra.mxu0 0.0
    %2321 = vmatprep.subr.mxu0 0.0
    %2322 = vmatpush1.msra.mxu0 0.0
    %2323 = vmatprep.subr.mxu0 0.0
    %2324 = vmatpush1.msra.mxu0 0.0
    %2325 = vmatprep.subr.mxu0 0.0
    %2326 = vmatpush1.msra.mxu0 0.0
    %2327 = vmatprep.subr.mxu0 0.0
    %2328 = vmatpush1.msra.mxu0 0.0
    %2329 = vmatprep.subr.mxu0 0.0
    %2330 = vmatpush1.msra.mxu0 0.0
    %2331 = vmatprep.subr.mxu0 0.0
    %2332 = vmatpush1.msra.mxu0 0.0
    %2333 = vmatprep.subr.mxu0 0.0
    %2334 = vmatpush1.msra.mxu0 0.0
    %2335 = vmatprep.subr.mxu0 0.0
    %2336 = vmatpush1.msra.mxu0 0.0
    %2337 = vmatprep.subr.mxu0 0.0
    %2338 = vmatpush1.msra.mxu0 0.0
    %2339 = vmatprep.subr.mxu0 0.0
    %2340 = vmatpush1.msra.mxu0 0.0
    %2341 = vmatprep.subr.mxu0 0.0
    %2342 = vmatpush1.msra.mxu0 0.0
    %2343 = vmatprep.subr.mxu0 0.0
    %2344 = vmatpush1.msra.mxu0 0.0
    %2345 = vmatprep.mubr.f32.mxu0 0.0
    %v2346 = vand.u32 %v1770, 4294901760
    %2347 = vmatmul.mubr.f32.gmra.mrb[0].mxu0 %v2346
    %v2348 = vpop.f32.mrb[0].mxu0
    %v2349 = vadd.f32 %v2267, %v2348
    %v2350 = vpop.f32.mrb[0].mxu0
    %v2351 = vadd.f32 %v2269, %v2350
    %2352 = vdwg.mxu0
    %v2353 = vand.u32 %v1750, 4294901760
    %2354 = vmatprep.subr.mxu0 %v2353
    %v2355 = vand.u32 %v1749, 4294901760
    %2356 = vmatpush1.msra.mxu0 %v2355
    %v2357 = vand.u32 %v1754, 4294901760
    %2358 = vmatprep.subr.mxu0 %v2357
    %v2359 = vand.u32 %v1753, 4294901760
    %2360 = vmatpush1.msra.mxu0 %v2359
    %v2361 = vand.u32 %v1758, 4294901760
    %2362 = vmatprep.subr.mxu0 %v2361
    %v2363 = vand.u32 %v1757, 4294901760
    %2364 = vmatpush1.msra.mxu0 %v2363
    %v2365 = vand.u32 %v1762, 4294901760
    %2366 = vmatprep.subr.mxu0 %v2365
    %v2367 = vand.u32 %v1761, 4294901760
    %2368 = vmatpush1.msra.mxu0 %v2367
    %v2369 = vand.u32 %v1782, 4294901760
    %2370 = vmatprep.subr.mxu0 %v2369
    %v2371 = vand.u32 %v1779, 4294901760
    %2372 = vmatpush1.msra.mxu0 %v2371
    %2373 = vmatprep.subr.mxu0 0.0
    %2374 = vmatpush1.msra.mxu0 0.0
    %2375 = vmatprep.subr.mxu0 0.0
    %2376 = vmatpush1.msra.mxu0 0.0
    %2377 = vmatprep.subr.mxu0 0.0
    %2378 = vmatpush1.msra.mxu0 0.0
    %2379 = vmatprep.subr.mxu0 0.0
    %2380 = vmatpush1.msra.mxu0 0.0
    %2381 = vmatprep.subr.mxu0 0.0
    %2382 = vmatpush1.msra.mxu0 0.0
    %2383 = vmatprep.subr.mxu0 0.0
    %2384 = vmatpush1.msra.mxu0 0.0
    %2385 = vmatprep.subr.mxu0 0.0
    %2386 = vmatpush1.msra.mxu0 0.0
    %2387 = vmatprep.subr.mxu0 0.0
    %2388 = vmatpush1.msra.mxu0 0.0
    %2389 = vmatprep.subr.mxu0 0.0
    %2390 = vmatpush1.msra.mxu0 0.0
    %2391 = vmatprep.subr.mxu0 0.0
    %2392 = vmatpush1.msra.mxu0 0.0
    %2393 = vmatprep.subr.mxu0 0.0
    %2394 = vmatpush1.msra.mxu0 0.0
    %2395 = vmatprep.subr.mxu0 0.0
    %2396 = vmatpush1.msra.mxu0 0.0
    %2397 = vmatprep.subr.mxu0 0.0
    %2398 = vmatpush1.msra.mxu0 0.0
    %2399 = vmatprep.subr.mxu0 0.0
    %2400 = vmatpush1.msra.mxu0 0.0
    %2401 = vmatprep.subr.mxu0 0.0
    %2402 = vmatpush1.msra.mxu0 0.0
    %2403 = vmatprep.subr.mxu0 0.0
    %2404 = vmatpush1.msra.mxu0 0.0
    %2405 = vmatprep.subr.mxu0 0.0
    %2406 = vmatpush1.msra.mxu0 0.0
    %2407 = vmatprep.subr.mxu0 0.0
    %2408 = vmatpush1.msra.mxu0 0.0
    %2409 = vmatprep.subr.mxu0 0.0
    %2410 = vmatpush1.msra.mxu0 0.0
    %2411 = vmatprep.subr.mxu0 0.0
    %2412 = vmatpush1.msra.mxu0 0.0
    %2413 = vmatprep.subr.mxu0 0.0
    %2414 = vmatpush1.msra.mxu0 0.0
    %2415 = vmatprep.subr.mxu0 0.0
    %2416 = vmatpush1.msra.mxu0 0.0
    %2417 = vmatprep.subr.mxu0 0.0
    %2418 = vmatpush1.msra.mxu0 0.0
    %2419 = vmatprep.subr.mxu0 0.0
    %2420 = vmatpush1.msra.mxu0 0.0
    %2421 = vmatprep.subr.mxu0 0.0
    %2422 = vmatpush1.msra.mxu0 0.0
    %2423 = vmatprep.subr.mxu0 0.0
    %2424 = vmatpush1.msra.mxu0 0.0
    %2425 = vmatprep.subr.mxu0 0.0
    %2426 = vmatpush1.msra.mxu0 0.0
    %2427 = vmatprep.mubr.f32.mxu0 0.0
    %v2428 = vand.u32 %v1770, 4294901760
    %v2429 = vsub.f32 %v1770, %v2428
    %v2430 = vand.u32 %v2429, 4294901760
    %v2431 = vsub.f32 %v2429, %v2430
    %v2432 = vand.u32 %v2431, 4294901760
    %2433 = vmatmul.mubr.f32.gmra.mrb[0].mxu0 %v2432
    %v2434 = vpop.f32.mrb[0].mxu0
    %v2435 = vadd.f32 %v1767, %v2434
    %v2436 = vpop.f32.mrb[0].mxu0
    %v2437 = vadd.f32 %v1767, %v2436
    %2438 = vdwg.mxu0
    %v2439 = vand.u32 %v1750, 4294901760
    %v2440 = vsub.f32 %v1750, %v2439
    %v2441 = vand.u32 %v2440, 4294901760
    %v2442 = vsub.f32 %v2440, %v2441
    %v2443 = vand.u32 %v2442, 4294901760
    %2444 = vmatprep.subr.mxu0 %v2443
    %v2445 = vand.u32 %v1749, 4294901760
    %v2446 = vsub.f32 %v1749, %v2445
    %v2447 = vand.u32 %v2446, 4294901760
    %v2448 = vsub.f32 %v2446, %v2447
    %v2449 = vand.u32 %v2448, 4294901760
    %2450 = vmatpush1.msra.mxu0 %v2449
    %v2451 = vand.u32 %v1754, 4294901760
    %v2452 = vsub.f32 %v1754, %v2451
    %v2453 = vand.u32 %v2452, 4294901760
    %v2454 = vsub.f32 %v2452, %v2453
    %v2455 = vand.u32 %v2454, 4294901760
    %2456 = vmatprep.subr.mxu0 %v2455
    %v2457 = vand.u32 %v1753, 4294901760
    %v2458 = vsub.f32 %v1753, %v2457
    %v2459 = vand.u32 %v2458, 4294901760
    %v2460 = vsub.f32 %v2458, %v2459
    %v2461 = vand.u32 %v2460, 4294901760
    %2462 = vmatpush1.msra.mxu0 %v2461
    %v2463 = vand.u32 %v1758, 4294901760
    %v2464 = vsub.f32 %v1758, %v2463
    %v2465 = vand.u32 %v2464, 4294901760
    %v2466 = vsub.f32 %v2464, %v2465
    %v2467 = vand.u32 %v2466, 4294901760
    %2468 = vmatprep.subr.mxu0 %v2467
    %v2469 = vand.u32 %v1757, 4294901760
    %v2470 = vsub.f32 %v1757, %v2469
    %v2471 = vand.u32 %v2470, 4294901760
    %v2472 = vsub.f32 %v2470, %v2471
    %v2473 = vand.u32 %v2472, 4294901760
    %2474 = vmatpush1.msra.mxu0 %v2473
    %v2475 = vand.u32 %v1762, 4294901760
    %v2476 = vsub.f32 %v1762, %v2475
    %v2477 = vand.u32 %v2476, 4294901760
    %v2478 = vsub.f32 %v2476, %v2477
    %v2479 = vand.u32 %v2478, 4294901760
    %2480 = vmatprep.subr.mxu0 %v2479
    %v2481 = vand.u32 %v1761, 4294901760
    %v2482 = vsub.f32 %v1761, %v2481
    %v2483 = vand.u32 %v2482, 4294901760
    %v2484 = vsub.f32 %v2482, %v2483
    %v2485 = vand.u32 %v2484, 4294901760
    %2486 = vmatpush1.msra.mxu0 %v2485
    %v2487 = vand.u32 %v1782, 4294901760
    %v2488 = vsub.f32 %v1782, %v2487
    %v2489 = vand.u32 %v2488, 4294901760
    %v2490 = vsub.f32 %v2488, %v2489
    %v2491 = vand.u32 %v2490, 4294901760
    %2492 = vmatprep.subr.mxu0 %v2491
    %v2493 = vand.u32 %v1779, 4294901760
    %v2494 = vsub.f32 %v1779, %v2493
    %v2495 = vand.u32 %v2494, 4294901760
    %v2496 = vsub.f32 %v2494, %v2495
    %v2497 = vand.u32 %v2496, 4294901760
    %2498 = vmatpush1.msra.mxu0 %v2497
    %2499 = vmatprep.subr.mxu0 0.0
    %2500 = vmatpush1.msra.mxu0 0.0
    %2501 = vmatprep.subr.mxu0 0.0
    %2502 = vmatpush1.msra.mxu0 0.0
    %2503 = vmatprep.subr.mxu0 0.0
    %2504 = vmatpush1.msra.mxu0 0.0
    %2505 = vmatprep.subr.mxu0 0.0
    %2506 = vmatpush1.msra.mxu0 0.0
    %2507 = vmatprep.subr.mxu0 0.0
    %2508 = vmatpush1.msra.mxu0 0.0
    %2509 = vmatprep.subr.mxu0 0.0
    %2510 = vmatpush1.msra.mxu0 0.0
    %2511 = vmatprep.subr.mxu0 0.0
    %2512 = vmatpush1.msra.mxu0 0.0
    %2513 = vmatprep.subr.mxu0 0.0
    %2514 = vmatpush1.msra.mxu0 0.0
    %2515 = vmatprep.subr.mxu0 0.0
    %2516 = vmatpush1.msra.mxu0 0.0
    %2517 = vmatprep.subr.mxu0 0.0
    %2518 = vmatpush1.msra.mxu0 0.0
    %2519 = vmatprep.subr.mxu0 0.0
    %2520 = vmatpush1.msra.mxu0 0.0
    %2521 = vmatprep.subr.mxu0 0.0
    %2522 = vmatpush1.msra.mxu0 0.0
    %2523 = vmatprep.subr.mxu0 0.0
    %2524 = vmatpush1.msra.mxu0 0.0
    %2525 = vmatprep.subr.mxu0 0.0
    %2526 = vmatpush1.msra.mxu0 0.0
    %2527 = vmatprep.subr.mxu0 0.0
    %2528 = vmatpush1.msra.mxu0 0.0
    %2529 = vmatprep.subr.mxu0 0.0
    %2530 = vmatpush1.msra.mxu0 0.0
    %2531 = vmatprep.subr.mxu0 0.0
    %2532 = vmatpush1.msra.mxu0 0.0
    %2533 = vmatprep.subr.mxu0 0.0
    %2534 = vmatpush1.msra.mxu0 0.0
    %2535 = vmatprep.subr.mxu0 0.0
    %2536 = vmatpush1.msra.mxu0 0.0
    %2537 = vmatprep.subr.mxu0 0.0
    %2538 = vmatpush1.msra.mxu0 0.0
    %2539 = vmatprep.subr.mxu0 0.0
    %2540 = vmatpush1.msra.mxu0 0.0
    %2541 = vmatprep.subr.mxu0 0.0
    %2542 = vmatpush1.msra.mxu0 0.0
    %2543 = vmatprep.subr.mxu0 0.0
    %2544 = vmatpush1.msra.mxu0 0.0
    %2545 = vmatprep.subr.mxu0 0.0
    %2546 = vmatpush1.msra.mxu0 0.0
    %2547 = vmatprep.subr.mxu0 0.0
    %2548 = vmatpush1.msra.mxu0 0.0
    %2549 = vmatprep.subr.mxu0 0.0
    %2550 = vmatpush1.msra.mxu0 0.0
    %2551 = vmatprep.subr.mxu0 0.0
    %2552 = vmatpush1.msra.mxu0 0.0
    %2553 = vmatprep.mubr.f32.mxu0 0.0
    %v2554 = vand.u32 %v1770, 4294901760
    %2555 = vmatmul.mubr.f32.gmra.mrb[0].mxu0 %v2554
    %v2556 = vpop.f32.mrb[0].mxu0
    %v2557 = vadd.f32 %v2435, %v2556
    %v2558 = vpop.f32.mrb[0].mxu0
    %v2559 = vadd.f32 %v2437, %v2558
    %2560 = vdwg.mxu0
    %v2561 = vand.u32 %v1750, 4294901760
    %v2562 = vsub.f32 %v1750, %v2561
    %2563 = vmatprep.subr.mxu0 %v2562
    %v2564 = vand.u32 %v1749, 4294901760
    %v2565 = vsub.f32 %v1749, %v2564
    %2566 = vmatpush1.msra.mxu0 %v2565
    %v2567 = vand.u32 %v1754, 4294901760
    %v2568 = vsub.f32 %v1754, %v2567
    %2569 = vmatprep.subr.mxu0 %v2568
    %v2570 = vand.u32 %v1753, 4294901760
    %v2571 = vsub.f32 %v1753, %v2570
    %2572 = vmatpush1.msra.mxu0 %v2571
    %v2573 = vand.u32 %v1758, 4294901760
    %v2574 = vsub.f32 %v1758, %v2573
    %2575 = vmatprep.subr.mxu0 %v2574
    %v2576 = vand.u32 %v1757, 4294901760
    %v2577 = vsub.f32 %v1757, %v2576
    %2578 = vmatpush1.msra.mxu0 %v2577
    %v2579 = vand.u32 %v1762, 4294901760
    %v2580 = vsub.f32 %v1762, %v2579
    %2581 = vmatprep.subr.mxu0 %v2580
    %v2582 = vand.u32 %v1761, 4294901760
    %v2583 = vsub.f32 %v1761, %v2582
    %2584 = vmatpush1.msra.mxu0 %v2583
    %v2585 = vand.u32 %v1782, 4294901760
    %v2586 = vsub.f32 %v1782, %v2585
    %2587 = vmatprep.subr.mxu0 %v2586
    %v2588 = vand.u32 %v1779, 4294901760
    %v2589 = vsub.f32 %v1779, %v2588
    %2590 = vmatpush1.msra.mxu0 %v2589
    %2591 = vmatprep.subr.mxu0 0.0
    %2592 = vmatpush1.msra.mxu0 0.0
    %2593 = vmatprep.subr.mxu0 0.0
    %2594 = vmatpush1.msra.mxu0 0.0
    %2595 = vmatprep.subr.mxu0 0.0
    %2596 = vmatpush1.msra.mxu0 0.0
    %2597 = vmatprep.subr.mxu0 0.0
    %2598 = vmatpush1.msra.mxu0 0.0
    %2599 = vmatprep.subr.mxu0 0.0
    %2600 = vmatpush1.msra.mxu0 0.0
    %2601 = vmatprep.subr.mxu0 0.0
    %2602 = vmatpush1.msra.mxu0 0.0
    %2603 = vmatprep.subr.mxu0 0.0
    %2604 = vmatpush1.msra.mxu0 0.0
    %2605 = vmatprep.subr.mxu0 0.0
    %2606 = vmatpush1.msra.mxu0 0.0
    %2607 = vmatprep.subr.mxu0 0.0
    %2608 = vmatpush1.msra.mxu0 0.0
    %2609 = vmatprep.subr.mxu0 0.0
    %2610 = vmatpush1.msra.mxu0 0.0
    %2611 = vmatprep.subr.mxu0 0.0
    %2612 = vmatpush1.msra.mxu0 0.0
    %2613 = vmatprep.subr.mxu0 0.0
    %2614 = vmatpush1.msra.mxu0 0.0
    %2615 = vmatprep.subr.mxu0 0.0
    %2616 = vmatpush1.msra.mxu0 0.0
    %2617 = vmatprep.subr.mxu0 0.0
    %2618 = vmatpush1.msra.mxu0 0.0
    %2619 = vmatprep.subr.mxu0 0.0
    %2620 = vmatpush1.msra.mxu0 0.0
    %2621 = vmatprep.subr.mxu0 0.0
    %2622 = vmatpush1.msra.mxu0 0.0
    %2623 = vmatprep.subr.mxu0 0.0
    %2624 = vmatpush1.msra.mxu0 0.0
    %2625 = vmatprep.subr.mxu0 0.0
    %2626 = vmatpush1.msra.mxu0 0.0
    %2627 = vmatprep.subr.mxu0 0.0
    %2628 = vmatpush1.msra.mxu0 0.0
    %2629 = vmatprep.subr.mxu0 0.0
    %2630 = vmatpush1.msra.mxu0 0.0
    %2631 = vmatprep.subr.mxu0 0.0
    %2632 = vmatpush1.msra.mxu0 0.0
    %2633 = vmatprep.subr.mxu0 0.0
    %2634 = vmatpush1.msra.mxu0 0.0
    %2635 = vmatprep.subr.mxu0 0.0
    %2636 = vmatpush1.msra.mxu0 0.0
    %2637 = vmatprep.subr.mxu0 0.0
    %2638 = vmatpush1.msra.mxu0 0.0
    %2639 = vmatprep.subr.mxu0 0.0
    %2640 = vmatpush1.msra.mxu0 0.0
    %2641 = vmatprep.subr.mxu0 0.0
    %2642 = vmatpush1.msra.mxu0 0.0
    %2643 = vmatprep.subr.mxu0 0.0
    %2644 = vmatpush1.msra.mxu0 0.0
    %2645 = vmatprep.mubr.f32.mxu0 0.0
    %v2646 = vand.u32 %v1770, 4294901760
    %v2647 = vsub.f32 %v1770, %v2646
    %2648 = vmatmul.mubr.f32.gmra.mrb[0].mxu0 %v2647
    %v2649 = vpop.f32.mrb[0].mxu0
    %v2650 = vadd.f32 %v2557, %v2649
    %v2651 = vpop.f32.mrb[0].mxu0
    %v2652 = vadd.f32 %v2559, %v2651
    %2653 = vdwg.mxu0
    %v2654 = vand.u32 %v1750, 4294901760
    %2655 = vmatprep.subr.mxu0 %v2654
    %v2656 = vand.u32 %v1749, 4294901760
    %2657 = vmatpush1.msra.mxu0 %v2656
    %v2658 = vand.u32 %v1754, 4294901760
    %2659 = vmatprep.subr.mxu0 %v2658
    %v2660 = vand.u32 %v1753, 4294901760
    %2661 = vmatpush1.msra.mxu0 %v2660
    %v2662 = vand.u32 %v1758, 4294901760
    %2663 = vmatprep.subr.mxu0 %v2662
    %v2664 = vand.u32 %v1757, 4294901760
    %2665 = vmatpush1.msra.mxu0 %v2664
    %v2666 = vand.u32 %v1762, 4294901760
    %2667 = vmatprep.subr.mxu0 %v2666
    %v2668 = vand.u32 %v1761, 4294901760
    %2669 = vmatpush1.msra.mxu0 %v2668
    %v2670 = vand.u32 %v1782, 4294901760
    %2671 = vmatprep.subr.mxu0 %v2670
    %v2672 = vand.u32 %v1779, 4294901760
    %2673 = vmatpush1.msra.mxu0 %v2672
    %2674 = vmatprep.subr.mxu0 0.0
    %2675 = vmatpush1.msra.mxu0 0.0
    %2676 = vmatprep.subr.mxu0 0.0
    %2677 = vmatpush1.msra.mxu0 0.0
    %2678 = vmatprep.subr.mxu0 0.0
    %2679 = vmatpush1.msra.mxu0 0.0
    %2680 = vmatprep.subr.mxu0 0.0
    %2681 = vmatpush1.msra.mxu0 0.0
    %2682 = vmatprep.subr.mxu0 0.0
    %2683 = vmatpush1.msra.mxu0 0.0
    %2684 = vmatprep.subr.mxu0 0.0
    %2685 = vmatpush1.msra.mxu0 0.0
    %2686 = vmatprep.subr.mxu0 0.0
    %2687 = vmatpush1.msra.mxu0 0.0
    %2688 = vmatprep.subr.mxu0 0.0
    %2689 = vmatpush1.msra.mxu0 0.0
    %2690 = vmatprep.subr.mxu0 0.0
    %2691 = vmatpush1.msra.mxu0 0.0
    %2692 = vmatprep.subr.mxu0 0.0
    %2693 = vmatpush1.msra.mxu0 0.0
    %2694 = vmatprep.subr.mxu0 0.0
    %2695 = vmatpush1.msra.mxu0 0.0
    %2696 = vmatprep.subr.mxu0 0.0
    %2697 = vmatpush1.msra.mxu0 0.0
    %2698 = vmatprep.subr.mxu0 0.0
    %2699 = vmatpush1.msra.mxu0 0.0
    %2700 = vmatprep.subr.mxu0 0.0
    %2701 = vmatpush1.msra.mxu0 0.0
    %2702 = vmatprep.subr.mxu0 0.0
    %2703 = vmatpush1.msra.mxu0 0.0
    %2704 = vmatprep.subr.mxu0 0.0
    %2705 = vmatpush1.msra.mxu0 0.0
    %2706 = vmatprep.subr.mxu0 0.0
    %2707 = vmatpush1.msra.mxu0 0.0
    %2708 = vmatprep.subr.mxu0 0.0
    %2709 = vmatpush1.msra.mxu0 0.0
    %2710 = vmatprep.subr.mxu0 0.0
    %2711 = vmatpush1.msra.mxu0 0.0
    %2712 = vmatprep.subr.mxu0 0.0
    %2713 = vmatpush1.msra.mxu0 0.0
    %2714 = vmatprep.subr.mxu0 0.0
    %2715 = vmatpush1.msra.mxu0 0.0
    %2716 = vmatprep.subr.mxu0 0.0
    %2717 = vmatpush1.msra.mxu0 0.0
    %2718 = vmatprep.subr.mxu0 0.0
    %2719 = vmatpush1.msra.mxu0 0.0
    %2720 = vmatprep.subr.mxu0 0.0
    %2721 = vmatpush1.msra.mxu0 0.0
    %2722 = vmatprep.subr.mxu0 0.0
    %2723 = vmatpush1.msra.mxu0 0.0
    %2724 = vmatprep.subr.mxu0 0.0
    %2725 = vmatpush1.msra.mxu0 0.0
    %2726 = vmatprep.subr.mxu0 0.0
    %2727 = vmatpush1.msra.mxu0 0.0
    %2728 = vmatprep.mubr.f32.mxu0 0.0
    %v2729 = vand.u32 %v1770, 4294901760
    %v2730 = vsub.f32 %v1770, %v2729
    %v2731 = vand.u32 %v2730, 4294901760
    %2732 = vmatmul.mubr.f32.gmra.mrb[0].mxu0 %v2731
    %v2733 = vpop.f32.mrb[0].mxu0
    %v2734 = vadd.f32 %v2650, %v2733
    %v2735 = vpop.f32.mrb[0].mxu0
    %v2736 = vadd.f32 %v2652, %v2735
    %2737 = vdwg.mxu0
    %v2738 = vand.u32 %v1750, 4294901760
    %v2739 = vsub.f32 %v1750, %v2738
    %v2740 = vand.u32 %v2739, 4294901760
    %2741 = vmatprep.subr.mxu0 %v2740
    %v2742 = vand.u32 %v1749, 4294901760
    %v2743 = vsub.f32 %v1749, %v2742
    %v2744 = vand.u32 %v2743, 4294901760
    %2745 = vmatpush1.msra.mxu0 %v2744
    %v2746 = vand.u32 %v1754, 4294901760
    %v2747 = vsub.f32 %v1754, %v2746
    %v2748 = vand.u32 %v2747, 4294901760
    %2749 = vmatprep.subr.mxu0 %v2748
    %v2750 = vand.u32 %v1753, 4294901760
    %v2751 = vsub.f32 %v1753, %v2750
    %v2752 = vand.u32 %v2751, 4294901760
    %2753 = vmatpush1.msra.mxu0 %v2752
    %v2754 = vand.u32 %v1758, 4294901760
    %v2755 = vsub.f32 %v1758, %v2754
    %v2756 = vand.u32 %v2755, 4294901760
    %2757 = vmatprep.subr.mxu0 %v2756
    %v2758 = vand.u32 %v1757, 4294901760
    %v2759 = vsub.f32 %v1757, %v2758
    %v2760 = vand.u32 %v2759, 4294901760
    %2761 = vmatpush1.msra.mxu0 %v2760
    %v2762 = vand.u32 %v1762, 4294901760
    %v2763 = vsub.f32 %v1762, %v2762
    %v2764 = vand.u32 %v2763, 4294901760
    %2765 = vmatprep.subr.mxu0 %v2764
    %v2766 = vand.u32 %v1761, 4294901760
    %v2767 = vsub.f32 %v1761, %v2766
    %v2768 = vand.u32 %v2767, 4294901760
    %2769 = vmatpush1.msra.mxu0 %v2768
    %v2770 = vand.u32 %v1782, 4294901760
    %v2771 = vsub.f32 %v1782, %v2770
    %v2772 = vand.u32 %v2771, 4294901760
    %2773 = vmatprep.subr.mxu0 %v2772
    %v2774 = vand.u32 %v1779, 4294901760
    %v2775 = vsub.f32 %v1779, %v2774
    %v2776 = vand.u32 %v2775, 4294901760
    %2777 = vmatpush1.msra.mxu0 %v2776
    %2778 = vmatprep.subr.mxu0 0.0
    %2779 = vmatpush1.msra.mxu0 0.0
    %2780 = vmatprep.subr.mxu0 0.0
    %2781 = vmatpush1.msra.mxu0 0.0
    %2782 = vmatprep.subr.mxu0 0.0
    %2783 = vmatpush1.msra.mxu0 0.0
    %2784 = vmatprep.subr.mxu0 0.0
    %2785 = vmatpush1.msra.mxu0 0.0
    %2786 = vmatprep.subr.mxu0 0.0
    %2787 = vmatpush1.msra.mxu0 0.0
    %2788 = vmatprep.subr.mxu0 0.0
    %2789 = vmatpush1.msra.mxu0 0.0
    %2790 = vmatprep.subr.mxu0 0.0
    %2791 = vmatpush1.msra.mxu0 0.0
    %2792 = vmatprep.subr.mxu0 0.0
    %2793 = vmatpush1.msra.mxu0 0.0
    %2794 = vmatprep.subr.mxu0 0.0
    %2795 = vmatpush1.msra.mxu0 0.0
    %2796 = vmatprep.subr.mxu0 0.0
    %2797 = vmatpush1.msra.mxu0 0.0
    %2798 = vmatprep.subr.mxu0 0.0
    %2799 = vmatpush1.msra.mxu0 0.0
    %2800 = vmatprep.subr.mxu0 0.0
    %2801 = vmatpush1.msra.mxu0 0.0
    %2802 = vmatprep.subr.mxu0 0.0
    %2803 = vmatpush1.msra.mxu0 0.0
    %2804 = vmatprep.subr.mxu0 0.0
    %2805 = vmatpush1.msra.mxu0 0.0
    %2806 = vmatprep.subr.mxu0 0.0
    %2807 = vmatpush1.msra.mxu0 0.0
    %2808 = vmatprep.subr.mxu0 0.0
    %2809 = vmatpush1.msra.mxu0 0.0
    %2810 = vmatprep.subr.mxu0 0.0
    %2811 = vmatpush1.msra.mxu0 0.0
    %2812 = vmatprep.subr.mxu0 0.0
    %2813 = vmatpush1.msra.mxu0 0.0
    %2814 = vmatprep.subr.mxu0 0.0
    %2815 = vmatpush1.msra.mxu0 0.0
    %2816 = vmatprep.subr.mxu0 0.0
    %2817 = vmatpush1.msra.mxu0 0.0
    %2818 = vmatprep.subr.mxu0 0.0
    %2819 = vmatpush1.msra.mxu0 0.0
    %2820 = vmatprep.subr.mxu0 0.0
    %2821 = vmatpush1.msra.mxu0 0.0
    %2822 = vmatprep.subr.mxu0 0.0
    %2823 = vmatpush1.msra.mxu0 0.0
    %2824 = vmatprep.subr.mxu0 0.0
    %2825 = vmatpush1.msra.mxu0 0.0
    %2826 = vmatprep.subr.mxu0 0.0
    %2827 = vmatpush1.msra.mxu0 0.0
    %2828 = vmatprep.subr.mxu0 0.0
    %2829 = vmatpush1.msra.mxu0 0.0
    %2830 = vmatprep.subr.mxu0 0.0
    %2831 = vmatpush1.msra.mxu0 0.0
    %2832 = vmatprep.mubr.f32.mxu0 0.0
    %v2833 = vand.u32 %v1770, 4294901760
    %2834 = vmatmul.mubr.f32.gmra.mrb[0].mxu0 %v2833
    %v2835 = vpop.f32.mrb[0].mxu0
    %v2836 = vadd.f32 %v2734, %v2835
    %v2837 = vpop.f32.mrb[0].mxu0
    %v2838 = vadd.f32 %v2736, %v2837
    %2839 = vdwg.mxu0
    %v2840 = vand.u32 %v1750, 4294901760
    %2841 = vmatprep.subr.mxu0 %v2840
    %v2842 = vand.u32 %v1749, 4294901760
    %2843 = vmatpush1.msra.mxu0 %v2842
    %v2844 = vand.u32 %v1754, 4294901760
    %2845 = vmatprep.subr.mxu0 %v2844
    %v2846 = vand.u32 %v1753, 4294901760
    %2847 = vmatpush1.msra.mxu0 %v2846
    %v2848 = vand.u32 %v1758, 4294901760
    %2849 = vmatprep.subr.mxu0 %v2848
    %v2850 = vand.u32 %v1757, 4294901760
    %2851 = vmatpush1.msra.mxu0 %v2850
    %v2852 = vand.u32 %v1762, 4294901760
    %2853 = vmatprep.subr.mxu0 %v2852
    %v2854 = vand.u32 %v1761, 4294901760
    %2855 = vmatpush1.msra.mxu0 %v2854
    %v2856 = vand.u32 %v1782, 4294901760
    %2857 = vmatprep.subr.mxu0 %v2856
    %v2858 = vand.u32 %v1779, 4294901760
    %2859 = vmatpush1.msra.mxu0 %v2858
    %2860 = vmatprep.subr.mxu0 0.0
    %2861 = vmatpush1.msra.mxu0 0.0
    %2862 = vmatprep.subr.mxu0 0.0
    %2863 = vmatpush1.msra.mxu0 0.0
    %2864 = vmatprep.subr.mxu0 0.0
    %2865 = vmatpush1.msra.mxu0 0.0
    %2866 = vmatprep.subr.mxu0 0.0
    %2867 = vmatpush1.msra.mxu0 0.0
    %2868 = vmatprep.subr.mxu0 0.0
    %2869 = vmatpush1.msra.mxu0 0.0
    %2870 = vmatprep.subr.mxu0 0.0
    %2871 = vmatpush1.msra.mxu0 0.0
    %2872 = vmatprep.subr.mxu0 0.0
    %2873 = vmatpush1.msra.mxu0 0.0
    %2874 = vmatprep.subr.mxu0 0.0
    %2875 = vmatpush1.msra.mxu0 0.0
    %2876 = vmatprep.subr.mxu0 0.0
    %2877 = vmatpush1.msra.mxu0 0.0
    %2878 = vmatprep.subr.mxu0 0.0
    %2879 = vmatpush1.msra.mxu0 0.0
    %2880 = vmatprep.subr.mxu0 0.0
    %2881 = vmatpush1.msra.mxu0 0.0
    %2882 = vmatprep.subr.mxu0 0.0
    %2883 = vmatpush1.msra.mxu0 0.0
    %2884 = vmatprep.subr.mxu0 0.0
    %2885 = vmatpush1.msra.mxu0 0.0
    %2886 = vmatprep.subr.mxu0 0.0
    %2887 = vmatpush1.msra.mxu0 0.0
    %2888 = vmatprep.subr.mxu0 0.0
    %2889 = vmatpush1.msra.mxu0 0.0
    %2890 = vmatprep.subr.mxu0 0.0
    %2891 = vmatpush1.msra.mxu0 0.0
    %2892 = vmatprep.subr.mxu0 0.0
    %2893 = vmatpush1.msra.mxu0 0.0
    %2894 = vmatprep.subr.mxu0 0.0
    %2895 = vmatpush1.msra.mxu0 0.0
    %2896 = vmatprep.subr.mxu0 0.0
    %2897 = vmatpush1.msra.mxu0 0.0
    %2898 = vmatprep.subr.mxu0 0.0
    %2899 = vmatpush1.msra.mxu0 0.0
    %2900 = vmatprep.subr.mxu0 0.0
    %2901 = vmatpush1.msra.mxu0 0.0
    %2902 = vmatprep.subr.mxu0 0.0
    %2903 = vmatpush1.msra.mxu0 0.0
    %2904 = vmatprep.subr.mxu0 0.0
    %2905 = vmatpush1.msra.mxu0 0.0
    %2906 = vmatprep.subr.mxu0 0.0
    %2907 = vmatpush1.msra.mxu0 0.0
    %2908 = vmatprep.subr.mxu0 0.0
    %2909 = vmatpush1.msra.mxu0 0.0
    %2910 = vmatprep.subr.mxu0 0.0
    %2911 = vmatpush1.msra.mxu0 0.0
    %2912 = vmatprep.subr.mxu0 0.0
    %2913 = vmatpush1.msra.mxu0 0.0
    %2914 = vmatprep.mubr.f32.mxu0 0.0
    %v2915 = vand.u32 %v1770, 4294901760
    %2916 = vmatmul.mubr.f32.gmra.mrb[0].mxu0 %v2915
    %v2917 = vpop.f32.mrb[0].mxu0
    %v2918 = vadd.f32 %v2836, %v2917
    %v2919 = vpop.f32.mrb[0].mxu0
    %v2920 = vadd.f32 %v2838, %v2919
    %2921 = vdwg.mxu0
    %v2922 = vadd.f32 %v2349, %v50
    %v2923 = vadd.f32 %v2351, %v63
    %v2924 = vadd.f32 %v2918, %v51
    %v2925 = vadd.f32 %v2920, %v64
    %v2930 = vcombine.low %v2922, %v2923
    %v2931 = vcombine.low %v2924, %v2925
    %2934 = vst [vmem:[#allocation7] sm:$0xff] %v2930
    %2935 = vst [vmem:[#allocation7 + $0x8] sm:$0xff] %v2931
    // Predicated region
    $region34: #{tpu_custom_call.1} parent=1 // pred_check
      _
    $region35: #{tpu_custom_call.1} parent=1 // pred_check_branch
      %2937 = sbr.rel (0) target = $region37
    $region36: #{tpu_custom_call.1} parent=1 // pred_region
      %s2939 = ssub.s32 256, 256
      %2940 = vsyncadd [#allocation4], %s2939
      %s2942 = sshll.u32 [#allocation7], 4
      %s2943 = int_to_ptr.vmem [resolvable:$true] %s2942
      %2945 = dma.vmem_to_hbm [thread:$0]  %s2943, 256, %s6, [#allocation4]
    $region37: #{tpu_custom_call.1} parent=1 // pred_fallthru
      _
    // Predicated region
    $region38: #{tpu_custom_call.1} parent=1 // pred_check
      _
    $region39: #{tpu_custom_call.1} parent=1 // pred_check_branch
      %2947 = sbr.rel (0) target = $region41
    $region40: #{tpu_custom_call.1} parent=1 // pred_region
      %2948 = dma.done [#allocation4], 256
    $region41: #{tpu_custom_call.1} parent=1 // pred_fallthru
      _
    %2949 = vsyncpa [#allocation3], 1
    %2950 = vsyncpa [#allocation6], 1
    %2951 = vsyncpa [#allocation4], 1

</llo_original>
